<compile_context>
chip_gen: v5e
topology: v5e:2x2
jax: 0.10.0
libtpu: 0.0.40
codegen_flags: <defaults>
</compile_context>

<pallas_src>
import functools

import jax
import jax.numpy as jnp
from jax.experimental import pallas as pl
from jax.experimental.pallas import tpu as pltpu


def _quadruplet_kernel(lhs_ref, rhs_ref, sq_r_ref, fine_r_ref, coarse_r_ref,
                       fine_c_ref, coarse_c_ref, sum_ref, cnt_ref, *, m1, m2):
    xl = lhs_ref[...]                                    # (TI, D) bf16 anchor tile (streamed)
    xr = rhs_ref[...]                                    # (B,  D) bf16 full rep (resident)
    TI = xl.shape[0]
    B = xr.shape[0]

    sq_r = sq_r_ref[...]                                 # (1, B) f32, padded cols = 1e30
    fine_r = fine_r_ref[...]                             # (1, B) int32, padded = -1
    coarse_r = coarse_r_ref[...]                         # (1, B) int32, padded = -1
    fine_c = fine_c_ref[...]                             # (TI, 1) int32 anchor labels
    coarse_c = coarse_c_ref[...]                         # (TI, 1) int32 anchor labels

    # Anchor squared norms from the LHS tile (f32, lane reduce -> XLU slot, VALU has headroom).
    xlf = xl.astype(jnp.float32)
    sq_c = jnp.sum(xlf * xlf, axis=1, keepdims=True)     # (TI, 1)

    # Gram on the MXU, contracting the feature dim of both operands (no transpose), f32 accum.
    gram = jax.lax.dot_general(xl, xr, (((1,), (1,)), ((), ())),
                               preferred_element_type=jnp.float32)   # (TI, B)

    # Squared pairwise euclidean distances (clamped like cdist**2 >= 0).
    dist = jnp.maximum(sq_c + (sq_r - 2.0 * gram), 0.0)  # (TI, B)

    # Global row/col indices (the anchor must be excluded from its own positive candidates).
    i0 = pl.program_id(0) * TI
    j_row = jax.lax.broadcasted_iota(jnp.int32, (1, B), 1)
    i_col = i0 + jax.lax.broadcasted_iota(jnp.int32, (TI, 1), 0)

    fine_eq = fine_c == fine_r                           # (TI, B)
    coarse_eq = coarse_c == coarse_r                     # (TI, B)

    # Positives: same fine class, not the anchor itself.  Padded columns (label -1) never
    # match a valid anchor's label, so no column-validity mask is needed here.
    same_fine = fine_eq & (i_col != j_row)
    # p_minus candidates: same coarse / different fine.  fine-equality implies coarse-equality
    # (coarse = fine2coarse[fine]), so this is exactly XOR; padded columns fall out naturally.
    p_minus_mask = coarse_eq ^ fine_eq
    # Negatives: different coarse.  Padded columns pass this mask but carry a huge sentinel
    # norm, so their hinge value is exactly 0 and never changes n_max or the validity test.
    neg_mask = ~coarse_eq

    # p_plus = lowest-index same-fine column; its distance via a one-hot gather-sum.
    p_plus = jnp.min(jnp.where(same_fine, j_row, B), axis=1, keepdims=True)    # (TI, 1)
    has_plus = p_plus < B
    d_pos = jnp.sum(jnp.where(j_row == p_plus, dist, 0.0), axis=1, keepdims=True)

    # Shared hinge argument t = d_pos - dist + (m1 - m2), reused by both mining passes.
    t = (d_pos + (m1 - m2)) - dist                       # (TI, B)

    neg_fill = jnp.float32(-1.0)   # fill < 0 doubles as the "candidate set is empty" flag
    # pm_max == reference in_coarse_loss for every surviving anchor.
    pm_max = jnp.max(jnp.where(p_minus_mask, jnp.maximum(t, 0.0), neg_fill),
                     axis=1, keepdims=True)              # (TI, 1)
    # d_pc - dist + m2 == t - pm_max + m2  ->  n_max == reference out_coarse_loss.
    n_max = jnp.max(jnp.where(neg_mask, jnp.maximum(t + (m2 - pm_max), 0.0), neg_fill),
                    axis=1, keepdims=True)               # (TI, 1)

    # valid <=> anchor is not padding AND all candidate sets are non-empty AND both hinges > 0
    # (pm_max > 0 / n_max > 0 subsume the non-empty-set checks).
    valid = (fine_c >= 0) & has_plus & (pm_max > 0.0) & (n_max > 0.0)
    contrib = jnp.where(valid, pm_max + n_max, 0.0)      # in_loss + out_loss

    sum_ref[...] = jnp.sum(contrib, keepdims=True)                    # (1, 1)
    cnt_ref[...] = jnp.sum(valid.astype(jnp.float32), keepdims=True)  # (1, 1)


def _ceil_to(x, m):
    return -(-x // m) * m


def _vmem_capacity_bytes():
    try:
        return int(pltpu.get_tpu_info().vmem_capacity_bytes)
    except Exception:
        return 64 * 1024 * 1024   # conservative fallback: v7x per-TensorCore VMEM


def quadruplet_loss(representation, target_fine, fine2coarse, m1=0.25, m2=0.15):
    """JAX/Pallas equivalent of QuadrupletLoss.forward.

    representation: (B, D) float embeddings.
    target_fine:    (B,)   int fine-class labels (>= 0).
    fine2coarse:    (num_fine,) int fine -> coarse map (the module's dataset.coarse_map).
    Returns a scalar float32 loss (0.0 if no valid quadruplets).
    """
    assert m1 > m2 > 0
    B0, D0 = representation.shape
    # bf16 MXU fast path on every generation; accumulation stays f32 inside the kernel.
    rep = representation.astype(jnp.bfloat16)
    fine = target_fine.astype(jnp.int32)
    coarse = fine2coarse.astype(jnp.int32)[fine]          # glue: per-sample coarse labels

    # Pad D (lane dim of rep) and B (lane dim of every (TILE_I, B) intermediate, sublane dim
    # of rep) to multiples of 128; padded samples carry sentinel label -1.
    D = _ceil_to(D0, 128)
    B = _ceil_to(B0, 128)
    if D != D0:
        rep = jnp.pad(rep, ((0, 0), (0, D - D0)))
    if B != B0:
        rep = jnp.pad(rep, ((0, B - B0), (0, 0)))
        fine = jnp.pad(fine, (0, B - B0), constant_values=-1)
        coarse = jnp.pad(coarse, (0, B - B0), constant_values=-1)

    # Column squared norms (1, B) in f32, from the same bf16 values the Gram uses.  Padded
    # columns get a huge sentinel so their negative-mining hinge is exactly zero and they can
    # never be mined (removes the per-element column-validity mask inside the kernel).
    xf = rep.astype(jnp.float32)
    sq = jnp.sum(xf * xf, axis=1)
    if B != B0:
        sq = jnp.where(jnp.arange(B, dtype=jnp.int32) < B0, sq, jnp.float32(1e30))
    sq_r = sq.reshape(1, B)

    fine_r = fine.reshape(1, B)
    coarse_r = coarse.reshape(1, B)
    fine_c = fine.reshape(B, 1)
    coarse_c = coarse.reshape(B, 1)

    # ---- row-tile selection & VMEM budget (generation-aware) ---------------------------------
    rep_isz = jnp.dtype(rep.dtype).itemsize               # 2 (bf16)
    vmem_cap = _vmem_capacity_bytes()
    budget = (vmem_cap * 3) // 4                           # headroom for compiler scratch / pipeline

    def _estimate(tile_i):
        wide = 12 * tile_i * B * 4                         # Mosaic-materialized (TILE_I, B) f32 temps
        reps = 2 * tile_i * D * rep_isz + 2 * B * D * rep_isz   # streamed LHS (2 bufs) + resident RHS
        small = 8 * B * 4 + 8 * tile_i * 4 + (1 << 20)
        return wide + reps + small

    tile_i = None
    for cand in (256, 128, 64, 32, 16):                    # multiples of 16 (bf16 sublane packing)
        if B % cand == 0 and _estimate(cand) <= budget:
            tile_i = cand
            break
    if tile_i is None:
        # TODO(synk): add an inner contraction (K) axis over D and/or a column (j) tile with a
        # running per-anchor accumulator so the resident RHS does not have to fit in VMEM.
        raise NotImplementedError(
            "quadruplet_loss: problem too large for single-pass row tiling "
            f"(B={B}, D={D}, VMEM budget={budget} bytes).")

    need = _estimate(tile_i)
    vmem_limit = int(min(need + need // 4, budget)) if need > (16 << 20) else None

    num_tiles = B // tile_i
    kernel = functools.partial(_quadruplet_kernel, m1=float(m1), m2=float(m2))

    # Note: the resident RHS could be single-buffered (pipeline_mode=pl.Buffered(1)) to shave
    # VMEM further; omitted here to keep the pipeline configuration on the well-trodden path.
    part_sum, part_cnt = pl.pallas_call(
        kernel,
        out_shape=(
            jax.ShapeDtypeStruct((num_tiles, 1, 1), jnp.float32),
            jax.ShapeDtypeStruct((num_tiles, 1, 1), jnp.float32),
        ),
        grid=(num_tiles,),
        in_specs=[
            pl.BlockSpec((tile_i, D), lambda i: (i, 0)),   # anchor (LHS) tile, streamed
            pl.BlockSpec((B, D), lambda i: (0, 0)),        # full rep (RHS), resident
            pl.BlockSpec((1, B), lambda i: (0, 0)),        # ||x_j||^2 row
            pl.BlockSpec((1, B), lambda i: (0, 0)),        # fine labels (row)
            pl.BlockSpec((1, B), lambda i: (0, 0)),        # coarse labels (row)
            pl.BlockSpec((tile_i, 1), lambda i: (i, 0)),   # fine labels (anchor column)
            pl.BlockSpec((tile_i, 1), lambda i: (i, 0)),   # coarse labels (anchor column)
        ],
        out_specs=(
            pl.BlockSpec((None, 1, 1), lambda i: (i, 0, 0)),   # per-tile partial sum
            pl.BlockSpec((None, 1, 1), lambda i: (i, 0, 0)),   # per-tile valid count
        ),
        compiler_params=pltpu.CompilerParams(
            dimension_semantics=("parallel",),             # v7x: the two TCs split the anchor tiles
            vmem_limit_bytes=vmem_limit,
        ),
    )(rep, rep, sq_r, fine_r, coarse_r, fine_c, coarse_c)

    total = jnp.sum(part_sum)
    count = jnp.sum(part_cnt)
    return jnp.where(count > 0.0, total / (2.0 * count), jnp.float32(0.0))


if __name__ == "__main__":
    key = jax.random.PRNGKey(0)
    B, D = 32, 32
    NUM_FINE, FINE_PER_COARSE = 8, 2

    k_rep, k_lbl = jax.random.split(key)
    representation = jax.random.normal(k_rep, (B, D), dtype=jnp.float32)
    target_fine = jax.random.randint(k_lbl, (B,), 0, NUM_FINE, dtype=jnp.int32)
    # Deterministic "dataset.coarse_map": two fine classes per coarse class.
    fine2coarse = jnp.arange(NUM_FINE, dtype=jnp.int32) // FINE_PER_COARSE

    loss = quadruplet_loss(representation, target_fine, fine2coarse, m1=0.25, m2=0.15)
    loss = jax.block_until_ready(loss)
    assert loss.shape == () and bool(jnp.isfinite(loss)) and float(loss) >= 0.0
    print("KERNEL_OK")
</pallas_src>

<mosaic_0001>
module attributes {stable_mosaic.version = 11 : i64} {
  func.func @_quadruplet_kernel(%arg0: i32, %arg1: memref<128x128xbf16, #tpu.memory_space<vmem>>, %arg2: memref<128x128xbf16, #tpu.memory_space<vmem>>, %arg3: memref<1x128xf32, #tpu.memory_space<vmem>>, %arg4: memref<1x128xi32, #tpu.memory_space<vmem>>, %arg5: memref<1x128xi32, #tpu.memory_space<vmem>>, %arg6: memref<128x1xi32, #tpu.memory_space<vmem>>, %arg7: memref<128x1xi32, #tpu.memory_space<vmem>>, %arg8: memref<1x1x1xf32, #tpu.memory_space<vmem>>, %arg9: memref<1x1x1xf32, #tpu.memory_space<vmem>>) attributes {dimension_semantics = [#tpu.dimension_semantics<parallel>], iteration_bounds = array<i64: 1>, scalar_prefetch = 0 : i64, scratch_operands = 0 : i64, tpu.core_type = #tpu.core_type<tc>, window_params = [{transform_indices = @transform_0, window_bounds = array<i64: 128, 128>}, {pipeline_mode = #tpu.pipeline_mode<synchronous>, transform_indices = @transform_1, window_bounds = array<i64: 128, 128>}, {pipeline_mode = #tpu.pipeline_mode<synchronous>, transform_indices = @transform_2, window_bounds = array<i64: 1, 128>}, {pipeline_mode = #tpu.pipeline_mode<synchronous>, transform_indices = @transform_3, window_bounds = array<i64: 1, 128>}, {pipeline_mode = #tpu.pipeline_mode<synchronous>, transform_indices = @transform_4, window_bounds = array<i64: 1, 128>}, {transform_indices = @transform_5, window_bounds = array<i64: 128, 1>}, {transform_indices = @transform_6, window_bounds = array<i64: 128, 1>}, {transform_indices = @transform_7, window_bounds = array<i64: 1, 1, 1>}, {transform_indices = @transform_8, window_bounds = array<i64: 1, 1, 1>}]} {
    %c0 = arith.constant 0 : index
    %c0_0 = arith.constant 0 : index
    %0 = vector.load %arg1[%c0, %c0_0] : memref<128x128xbf16, #tpu.memory_space<vmem>>, vector<128x128xbf16>
    %c0_1 = arith.constant 0 : index
    %c0_2 = arith.constant 0 : index
    %1 = vector.load %arg2[%c0_1, %c0_2] : memref<128x128xbf16, #tpu.memory_space<vmem>>, vector<128x128xbf16>
    %c0_3 = arith.constant 0 : index
    %c0_4 = arith.constant 0 : index
    %2 = vector.load %arg3[%c0_3, %c0_4] : memref<1x128xf32, #tpu.memory_space<vmem>>, vector<1x128xf32>
    %c0_5 = arith.constant 0 : index
    %c0_6 = arith.constant 0 : index
    %3 = vector.load %arg4[%c0_5, %c0_6] : memref<1x128xi32, #tpu.memory_space<vmem>>, vector<1x128xi32>
    %c0_7 = arith.constant 0 : index
    %c0_8 = arith.constant 0 : index
    %4 = vector.load %arg5[%c0_7, %c0_8] : memref<1x128xi32, #tpu.memory_space<vmem>>, vector<1x128xi32>
    %c0_9 = arith.constant 0 : index
    %c0_10 = arith.constant 0 : index
    %5 = vector.load %arg6[%c0_9, %c0_10] : memref<128x1xi32, #tpu.memory_space<vmem>>, vector<128x1xi32>
    %c0_11 = arith.constant 0 : index
    %c0_12 = arith.constant 0 : index
    %6 = vector.load %arg7[%c0_11, %c0_12] : memref<128x1xi32, #tpu.memory_space<vmem>>, vector<128x1xi32>
    %7 = arith.extf %0 : vector<128x128xbf16> to vector<128x128xf32>
    %8 = arith.mulf %7, %7 : vector<128x128xf32>
    %cst = arith.constant dense<0.000000e+00> : vector<128xf32>
    %9 = vector.multi_reduction <add>, %8, %cst [1] : vector<128x128xf32> to vector<128xf32>
    %10 = vector.shape_cast %9 : vector<128xf32> to vector<128x1xf32>
    %cst_13 = arith.constant dense<0.000000e+00> : vector<128x128xf32>
    %11 = tpu.matmul %0, %1, %cst_13 {dimension_numbers = #tpu.dot_dimension_numbers<[1], [1], [0], [0], [0, 0, 1, 0], [], []>} : vector<128x128xbf16>, vector<128x128xbf16>, vector<128x128xf32> -> vector<128x128xf32>
    %cst_14 = arith.constant 2.000000e+00 : f32
    %12 = vector.broadcast %cst_14 : f32 to vector<128x128xf32>
    %13 = arith.mulf %12, %11 : vector<128x128xf32>
    %14 = vector.broadcast %2 : vector<1x128xf32> to vector<128x128xf32>
    %15 = arith.subf %14, %13 : vector<128x128xf32>
    %16 = vector.broadcast %10 : vector<128x1xf32> to vector<128x128xf32>
    %17 = arith.addf %16, %15 : vector<128x128xf32>
    %cst_15 = arith.constant 0.000000e+00 : f32
    %18 = vector.broadcast %cst_15 : f32 to vector<128x128xf32>
    %19 = arith.maximumf %17, %18 : vector<128x128xf32>
    %c128_i32 = arith.constant 128 : i32
    %20 = arith.muli %arg0, %c128_i32 : i32
    %21 = tpu.iota {dimensions = array<i32: 1>} : vector<1x128xi32>
    %22 = tpu.iota {dimensions = array<i32: 0>} : vector<128x1xi32>
    %23 = vector.broadcast %20 : i32 to vector<128x1xi32>
    %24 = arith.addi %23, %22 : vector<128x1xi32>
    %25 = vector.broadcast %5 : vector<128x1xi32> to vector<128x128xi32>
    %26 = vector.broadcast %3 : vector<1x128xi32> to vector<128x128xi32>
    %27 = arith.cmpi eq, %25, %26 : vector<128x128xi32>
    %28 = vector.broadcast %6 : vector<128x1xi32> to vector<128x128xi32>
    %29 = vector.broadcast %4 : vector<1x128xi32> to vector<128x128xi32>
    %30 = arith.cmpi eq, %28, %29 : vector<128x128xi32>
    %31 = vector.broadcast %24 : vector<128x1xi32> to vector<128x128xi32>
    %32 = vector.broadcast %21 : vector<1x128xi32> to vector<128x128xi32>
    %33 = arith.cmpi ne, %31, %32 : vector<128x128xi32>
    %34 = arith.andi %27, %33 : vector<128x128xi1>
    %35 = arith.xori %30, %27 : vector<128x128xi1>
    %cst_16 = arith.constant dense<true> : vector<128x128xi1>
    %36 = arith.xori %30, %cst_16 : vector<128x128xi1>
    %c128_i32_17 = arith.constant 128 : i32
    %37 = vector.shape_cast %21 : vector<1x128xi32> to vector<1x128xi32>
    %38 = vector.broadcast %37 : vector<1x128xi32> to vector<128x128xi32>
    %39 = vector.broadcast %c128_i32_17 : i32 to vector<128x128xi32>
    %40 = arith.select %34, %38, %39 : vector<128x128xi1>, vector<128x128xi32>
    %cst_18 = arith.constant dense<2147483647> : vector<128xi32>
    %41 = vector.multi_reduction <minsi>, %40, %cst_18 [1] : vector<128x128xi32> to vector<128xi32>
    %42 = vector.shape_cast %41 : vector<128xi32> to vector<128x1xi32>
    %c128_i32_19 = arith.constant 128 : i32
    %43 = vector.broadcast %c128_i32_19 : i32 to vector<128x1xi32>
    %44 = arith.cmpi slt, %42, %43 : vector<128x1xi32>
    %45 = vector.broadcast %21 : vector<1x128xi32> to vector<128x128xi32>
    %46 = vector.broadcast %42 : vector<128x1xi32> to vector<128x128xi32>
    %47 = arith.cmpi eq, %45, %46 : vector<128x128xi32>
    %cst_20 = arith.constant 0.000000e+00 : f32
    %48 = vector.broadcast %cst_20 : f32 to vector<128x128xf32>
    %49 = arith.select %47, %19, %48 : vector<128x128xi1>, vector<128x128xf32>
    %cst_21 = arith.constant dense<0.000000e+00> : vector<128xf32>
    %50 = vector.multi_reduction <add>, %49, %cst_21 [1] : vector<128x128xf32> to vector<128xf32>
    %51 = vector.shape_cast %50 : vector<128xf32> to vector<128x1xf32>
    %cst_22 = arith.constant 1.000000e-01 : f32
    %52 = vector.broadcast %cst_22 : f32 to vector<128x1xf32>
    %53 = arith.addf %51, %52 : vector<128x1xf32>
    %54 = vector.broadcast %53 : vector<128x1xf32> to vector<128x128xf32>
    %55 = arith.subf %54, %19 : vector<128x128xf32>
    %cst_23 = arith.constant 0.000000e+00 : f32
    %56 = vector.broadcast %cst_23 : f32 to vector<128x128xf32>
    %57 = arith.maximumf %55, %56 : vector<128x128xf32>
    %cst_24 = arith.constant -1.000000e+00 : f32
    %58 = vector.broadcast %cst_24 : f32 to vector<128x128xf32>
    %59 = arith.select %35, %57, %58 : vector<128x128xi1>, vector<128x128xf32>
    %cst_25 = arith.constant dense<0xFF800000> : vector<128xf32>
    %60 = vector.multi_reduction <maximumf>, %59, %cst_25 [1] : vector<128x128xf32> to vector<128xf32>
    %61 = vector.shape_cast %60 : vector<128xf32> to vector<128x1xf32>
    %cst_26 = arith.constant 1.500000e-01 : f32
    %62 = vector.broadcast %cst_26 : f32 to vector<128x1xf32>
    %63 = arith.subf %62, %61 : vector<128x1xf32>
    %64 = vector.broadcast %63 : vector<128x1xf32> to vector<128x128xf32>
    %65 = arith.addf %55, %64 : vector<128x128xf32>
    %cst_27 = arith.constant 0.000000e+00 : f32
    %66 = vector.broadcast %cst_27 : f32 to vector<128x128xf32>
    %67 = arith.maximumf %65, %66 : vector<128x128xf32>
    %cst_28 = arith.constant -1.000000e+00 : f32
    %68 = vector.broadcast %cst_28 : f32 to vector<128x128xf32>
    %69 = arith.select %36, %67, %68 : vector<128x128xi1>, vector<128x128xf32>
    %cst_29 = arith.constant dense<0xFF800000> : vector<128xf32>
    %70 = vector.multi_reduction <maximumf>, %69, %cst_29 [1] : vector<128x128xf32> to vector<128xf32>
    %71 = vector.shape_cast %70 : vector<128xf32> to vector<128x1xf32>
    %c0_i32 = arith.constant 0 : i32
    %72 = vector.broadcast %c0_i32 : i32 to vector<128x1xi32>
    %73 = arith.cmpi sge, %5, %72 : vector<128x1xi32>
    %74 = arith.andi %73, %44 : vector<128x1xi1>
    %cst_30 = arith.constant 0.000000e+00 : f32
    %75 = vector.broadcast %cst_30 : f32 to vector<128x1xf32>
    %76 = arith.cmpf ogt, %61, %75 : vector<128x1xf32>
    %77 = arith.andi %74, %76 : vector<128x1xi1>
    %cst_31 = arith.constant 0.000000e+00 : f32
    %78 = vector.broadcast %cst_31 : f32 to vector<128x1xf32>
    %79 = arith.cmpf ogt, %71, %78 : vector<128x1xf32>
    %80 = arith.andi %77, %79 : vector<128x1xi1>
    %81 = arith.addf %61, %71 : vector<128x1xf32>
    %cst_32 = arith.constant 0.000000e+00 : f32
    %82 = vector.broadcast %cst_32 : f32 to vector<128x1xf32>
    %83 = arith.select %80, %81, %82 : vector<128x1xi1>, vector<128x1xf32>
    %84 = vector.shape_cast %83 : vector<128x1xf32> to vector<1x128x1xf32>
    %cst_33 = arith.constant dense<0.000000e+00> : vector<1xf32>
    %85 = vector.multi_reduction <add>, %84, %cst_33 [1, 2] : vector<1x128x1xf32> to vector<1xf32>
    %86 = vector.shape_cast %85 : vector<1xf32> to vector<1x1x1xf32>
    %87 = vector.extract %86[0, 0, 0] : f32 from vector<1x1x1xf32>
    %88 = vector.broadcast %87 : f32 to vector<1x1xf32>
    %c0_34 = arith.constant 0 : index
    %c0_35 = arith.constant 0 : index
    %c0_36 = arith.constant 0 : index
    %89 = vector.load %arg8[%c0_34, %c0_35, %c0_36] : memref<1x1x1xf32, #tpu.memory_space<vmem>>, vector<1x1x1xf32>
    %90 = vector.shape_cast %89 : vector<1x1x1xf32> to vector<1x1xf32>
    %91 = vector.shape_cast %88 : vector<1x1xf32> to vector<1x1x1xf32>
    tpu.vector_store %arg8[%c0_34, %c0_35, %c0_36], %91 {strides = array<i32>} : memref<1x1x1xf32, #tpu.memory_space<vmem>>, vector<1x1x1xf32>,
    %92 = arith.extui %80 : vector<128x1xi1> to vector<128x1xi32>
    %93 = arith.sitofp %92 : vector<128x1xi32> to vector<128x1xf32>
    %94 = vector.shape_cast %93 : vector<128x1xf32> to vector<1x128x1xf32>
    %cst_37 = arith.constant dense<0.000000e+00> : vector<1xf32>
    %95 = vector.multi_reduction <add>, %94, %cst_37 [1, 2] : vector<1x128x1xf32> to vector<1xf32>
    %96 = vector.shape_cast %95 : vector<1xf32> to vector<1x1x1xf32>
    %97 = vector.extract %96[0, 0, 0] : f32 from vector<1x1x1xf32>
    %98 = vector.broadcast %97 : f32 to vector<1x1xf32>
    %c0_38 = arith.constant 0 : index
    %c0_39 = arith.constant 0 : index
    %c0_40 = arith.constant 0 : index
    %99 = vector.load %arg9[%c0_38, %c0_39, %c0_40] : memref<1x1x1xf32, #tpu.memory_space<vmem>>, vector<1x1x1xf32>
    %100 = vector.shape_cast %99 : vector<1x1x1xf32> to vector<1x1xf32>
    %101 = vector.shape_cast %98 : vector<1x1xf32> to vector<1x1x1xf32>
    tpu.vector_store %arg9[%c0_38, %c0_39, %c0_40], %101 {strides = array<i32>} : memref<1x1x1xf32, #tpu.memory_space<vmem>>, vector<1x1x1xf32>,
    return
  }
  func.func @transform_0(%arg0: i32) -> (i32, i32) {
    %c0_i32 = arith.constant 0 : i32
    %c0_i32_0 = arith.constant 0 : i32
    return %arg0, %c0_i32 : i32, i32
  }
  func.func @transform_1(%arg0: i32) -> (i32, i32) {
    %c0_i32 = arith.constant 0 : i32
    %c0_i32_0 = arith.constant 0 : i32
    %c0_i32_1 = arith.constant 0 : i32
    return %c0_i32, %c0_i32_0 : i32, i32
  }
  func.func @transform_2(%arg0: i32) -> (i32, i32) {
    %c0_i32 = arith.constant 0 : i32
    %c0_i32_0 = arith.constant 0 : i32
    %c0_i32_1 = arith.constant 0 : i32
    return %c0_i32, %c0_i32_0 : i32, i32
  }
  func.func @transform_3(%arg0: i32) -> (i32, i32) {
    %c0_i32 = arith.constant 0 : i32
    %c0_i32_0 = arith.constant 0 : i32
    %c0_i32_1 = arith.constant 0 : i32
    return %c0_i32, %c0_i32_0 : i32, i32
  }
  func.func @transform_4(%arg0: i32) -> (i32, i32) {
    %c0_i32 = arith.constant 0 : i32
    %c0_i32_0 = arith.constant 0 : i32
    %c0_i32_1 = arith.constant 0 : i32
    return %c0_i32, %c0_i32_0 : i32, i32
  }
  func.func @transform_5(%arg0: i32) -> (i32, i32) {
    %c0_i32 = arith.constant 0 : i32
    %c0_i32_0 = arith.constant 0 : i32
    return %arg0, %c0_i32 : i32, i32
  }
  func.func @transform_6(%arg0: i32) -> (i32, i32) {
    %c0_i32 = arith.constant 0 : i32
    %c0_i32_0 = arith.constant 0 : i32
    return %arg0, %c0_i32 : i32, i32
  }
  func.func @transform_7(%arg0: i32) -> (i32, i32, i32) {
    %c0_i32 = arith.constant 0 : i32
    %c0_i32_0 = arith.constant 0 : i32
    %c0_i32_1 = arith.constant 0 : i32
    return %arg0, %c0_i32, %c0_i32_0 : i32, i32, i32
  }
  func.func @transform_8(%arg0: i32) -> (i32, i32, i32) {
    %c0_i32 = arith.constant 0 : i32
    %c0_i32_0 = arith.constant 0 : i32
    %c0_i32_1 = arith.constant 0 : i32
    return %arg0, %c0_i32, %c0_i32_0 : i32, i32, i32
  }
}

</mosaic_0001>

<llo_original>
// kernel: tpu_custom_call.1
$region0: #{tpu_custom_call.1}
  #allocation0 [shape = 'u32[]', space=smem, size = 0x4, offset = 0x4, fixed_abs, tag = 'smem constant byte address 0x4 - core index']
  #allocation1 [shape = 'u32[72,128]{1,0:T(1,128)}', space=vmem, size = 0x9000, scoped, tag = 'internal scratch']
  %s0 = inlined_call_operand.vmem [shape: bf16[128,128], index: 0, kind: input, shape index: {}]
  %s1 = inlined_call_operand.vmem [shape: bf16[128,128], index: 1, kind: input, shape index: {}]
  %s2 = inlined_call_operand.vmem [shape: f32[1,128], index: 2, kind: input, shape index: {}]
  %s3 = inlined_call_operand.vmem [shape: s32[1,128], index: 3, kind: input, shape index: {}]
  %s4 = inlined_call_operand.vmem [shape: s32[1,128], index: 4, kind: input, shape index: {}]
  %s5 = inlined_call_operand.vmem [shape: s32[128,1], index: 5, kind: input, shape index: {}]
  %s6 = inlined_call_operand.vmem [shape: s32[128,1], index: 6, kind: input, shape index: {}]
  %s7 = inlined_call_operand.hbm [shape: f32[1,1,1], index: 7, kind: output, shape index: {0}]
  %s8 = inlined_call_operand.hbm [shape: f32[1,1,1], index: 8, kind: output, shape index: {1}]
  %9 = xla_tuple %s7, %s8
  %s10 = sld [smem:[#allocation0]]
  $region46: #{tpu_custom_call.1} parent=0
    _
  %s12 = ssub.s32 1, %s10
  %s13 = scalar_select 0, %s12, %s10
  $region1: #{tpu_custom_call.1} parent=0
    #allocation2 [shape = 'u8[512]{0}', space=vmem, size = 0x400, scoped, tag = 'output window, operand 0, single buffered']
    #allocation3 [shape = 's32[1]{0}', space=sflag, size = 0x4, scoped, tag = 'scoped memory for tpu_custom_call.1']
    #allocation4 [shape = 'u8[512]{0}', space=vmem, size = 0x400, scoped, tag = 'output window, operand 1, single buffered']
    #allocation5 [shape = 's32[1]{0}', space=sflag, size = 0x4, scoped, tag = 'scoped memory for tpu_custom_call.1']
    %14 = vsyncpa [#allocation3], 0
    %15 = vsyncpa [#allocation5], 0
    // Predicated region
    $region2: #{tpu_custom_call.1} parent=1 // pred_check
      _
    $region3: #{tpu_custom_call.1} parent=1 // pred_check_branch
      %17 = sbr.rel (0) target = $region5
    $region4: #{tpu_custom_call.1} parent=1 // pred_region
      _
    $region5: #{tpu_custom_call.1} parent=1 // pred_fallthru
      _
    // Predicated region
    $region6: #{tpu_custom_call.1} parent=1 // pred_check
      _
    $region7: #{tpu_custom_call.1} parent=1 // pred_check_branch
      %19 = sbr.rel (0) target = $region9
    $region8: #{tpu_custom_call.1} parent=1 // pred_region
      _
    $region9: #{tpu_custom_call.1} parent=1 // pred_fallthru
      _
    // Predicated region
    $region10: #{tpu_custom_call.1} parent=1 // pred_check
      _
    $region11: #{tpu_custom_call.1} parent=1 // pred_check_branch
      %21 = sbr.rel (0) target = $region13
    $region12: #{tpu_custom_call.1} parent=1 // pred_region
      _
    $region13: #{tpu_custom_call.1} parent=1 // pred_fallthru
      _
    // Predicated region
    $region14: #{tpu_custom_call.1} parent=1 // pred_check
      _
    $region15: #{tpu_custom_call.1} parent=1 // pred_check_branch
      %23 = sbr.rel (0) target = $region17
    $region16: #{tpu_custom_call.1} parent=1 // pred_region
      _
    $region17: #{tpu_custom_call.1} parent=1 // pred_fallthru
      _
    // Predicated region
    $region18: #{tpu_custom_call.1} parent=1 // pred_check
      _
    $region19: #{tpu_custom_call.1} parent=1 // pred_check_branch
      %25 = sbr.rel (0) target = $region21
    $region20: #{tpu_custom_call.1} parent=1 // pred_region
      _
    $region21: #{tpu_custom_call.1} parent=1 // pred_fallthru
      _
    // Predicated region
    $region22: #{tpu_custom_call.1} parent=1 // pred_check
      _
    $region23: #{tpu_custom_call.1} parent=1 // pred_check_branch
      %27 = sbr.rel (0) target = $region25
    $region24: #{tpu_custom_call.1} parent=1 // pred_region
      _
    $region25: #{tpu_custom_call.1} parent=1 // pred_fallthru
      _
    // Predicated region
    $region26: #{tpu_custom_call.1} parent=1 // pred_check
      _
    $region27: #{tpu_custom_call.1} parent=1 // pred_check_branch
      %29 = sbr.rel (0) target = $region29
    $region28: #{tpu_custom_call.1} parent=1 // pred_region
      _
    $region29: #{tpu_custom_call.1} parent=1 // pred_fallthru
      _
    %v30 = vld [vmem:[%s0] sm:$0xf]
    %v31 = vld [vmem:[%s0 + $0x4] sm:$0xf]
    %v32 = vld [vmem:[%s0 + $0x8] sm:$0xf]
    %v33 = vld [vmem:[%s0 + $0xc] sm:$0xf]
    %v34 = vld [vmem:[%s0 + $0x10] sm:$0xf]
    %v35 = vld [vmem:[%s0 + $0x14] sm:$0xf]
    %v36 = vld [vmem:[%s0 + $0x18] sm:$0xf]
    %v37 = vld [vmem:[%s0 + $0x1c] sm:$0xf]
    %v38 = vld [vmem:[%s0 + $0x20] sm:$0xf]
    %v39 = vld [vmem:[%s0 + $0x24] sm:$0xf]
    %v40 = vld [vmem:[%s0 + $0x28] sm:$0xf]
    %v41 = vld [vmem:[%s0 + $0x2c] sm:$0xf]
    %v42 = vld [vmem:[%s0 + $0x30] sm:$0xf]
    %v43 = vld [vmem:[%s0 + $0x34] sm:$0xf]
    %v44 = vld [vmem:[%s0 + $0x38] sm:$0xf]
    %v45 = vld [vmem:[%s0 + $0x3c] sm:$0xf]
    %v46 = vld [vmem:[%s1] sm:$0xf]
    %v47 = vld [vmem:[%s1 + $0x4] sm:$0xf]
    %v48 = vld [vmem:[%s1 + $0x8] sm:$0xf]
    %v49 = vld [vmem:[%s1 + $0xc] sm:$0xf]
    %v50 = vld [vmem:[%s1 + $0x10] sm:$0xf]
    %v51 = vld [vmem:[%s1 + $0x14] sm:$0xf]
    %v52 = vld [vmem:[%s1 + $0x18] sm:$0xf]
    %v53 = vld [vmem:[%s1 + $0x1c] sm:$0xf]
    %v54 = vld [vmem:[%s1 + $0x20] sm:$0xf]
    %v55 = vld [vmem:[%s1 + $0x24] sm:$0xf]
    %v56 = vld [vmem:[%s1 + $0x28] sm:$0xf]
    %v57 = vld [vmem:[%s1 + $0x2c] sm:$0xf]
    %v58 = vld [vmem:[%s1 + $0x30] sm:$0xf]
    %v59 = vld [vmem:[%s1 + $0x34] sm:$0xf]
    %v60 = vld [vmem:[%s1 + $0x38] sm:$0xf]
    %v61 = vld [vmem:[%s1 + $0x3c] sm:$0xf]
    %v62 = vld [vmem:[%s2] sm:$0x1]
    %v63 = vld [vmem:[%s3] sm:$0x1]
    %v64 = vld [vmem:[%s4] sm:$0x1]
    %v65 = vld [vmem:[%s5] sm:$0xff]
    %v66 = vld [vmem:[%s5 + $0x8] sm:$0xff]
    %v67 = vld [vmem:[%s5 + $0x10] sm:$0xff]
    %v68 = vld [vmem:[%s5 + $0x18] sm:$0xff]
    %v69 = vld [vmem:[%s5 + $0x20] sm:$0xff]
    %v70 = vld [vmem:[%s5 + $0x28] sm:$0xff]
    %v71 = vld [vmem:[%s5 + $0x30] sm:$0xff]
    %v72 = vld [vmem:[%s5 + $0x38] sm:$0xff]
    %v73 = vld [vmem:[%s5 + $0x40] sm:$0xff]
    %v74 = vld [vmem:[%s5 + $0x48] sm:$0xff]
    %v75 = vld [vmem:[%s5 + $0x50] sm:$0xff]
    %v76 = vld [vmem:[%s5 + $0x58] sm:$0xff]
    %v77 = vld [vmem:[%s5 + $0x60] sm:$0xff]
    %v78 = vld [vmem:[%s5 + $0x68] sm:$0xff]
    %v79 = vld [vmem:[%s5 + $0x70] sm:$0xff]
    %v80 = vld [vmem:[%s5 + $0x78] sm:$0xff]
    %v81 = vld [vmem:[%s6] sm:$0xff]
    %v82 = vld [vmem:[%s6 + $0x8] sm:$0xff]
    %v83 = vld [vmem:[%s6 + $0x10] sm:$0xff]
    %v84 = vld [vmem:[%s6 + $0x18] sm:$0xff]
    %v85 = vld [vmem:[%s6 + $0x20] sm:$0xff]
    %v86 = vld [vmem:[%s6 + $0x28] sm:$0xff]
    %v87 = vld [vmem:[%s6 + $0x30] sm:$0xff]
    %v88 = vld [vmem:[%s6 + $0x38] sm:$0xff]
    %v89 = vld [vmem:[%s6 + $0x40] sm:$0xff]
    %v90 = vld [vmem:[%s6 + $0x48] sm:$0xff]
    %v91 = vld [vmem:[%s6 + $0x50] sm:$0xff]
    %v92 = vld [vmem:[%s6 + $0x58] sm:$0xff]
    %v93 = vld [vmem:[%s6 + $0x60] sm:$0xff]
    %v94 = vld [vmem:[%s6 + $0x68] sm:$0xff]
    %v95 = vld [vmem:[%s6 + $0x70] sm:$0xff]
    %v96 = vld [vmem:[%s6 + $0x78] sm:$0xff]
    %v97 = vunpack.c.l.bf16 %v30
    %v98 = vunpack.c.l.bf16 %v31
    %v99 = vunpack.c.l.bf16 %v32
    %v100 = vunpack.c.l.bf16 %v33
    %v101 = vunpack.c.l.bf16 %v34
    %v102 = vunpack.c.l.bf16 %v35
    %v103 = vunpack.c.l.bf16 %v36
    %v104 = vunpack.c.l.bf16 %v37
    %v105 = vunpack.c.l.bf16 %v38
    %v106 = vunpack.c.l.bf16 %v39
    %v107 = vunpack.c.l.bf16 %v40
    %v108 = vunpack.c.l.bf16 %v41
    %v109 = vunpack.c.l.bf16 %v42
    %v110 = vunpack.c.l.bf16 %v43
    %v111 = vunpack.c.l.bf16 %v44
    %v112 = vunpack.c.l.bf16 %v45
    %v113 = vmul.f32 %v97, %v97
    %v114 = vmul.f32 %v98, %v98
    %v115 = vmul.f32 %v99, %v99
    %v116 = vmul.f32 %v100, %v100
    %v117 = vmul.f32 %v101, %v101
    %v118 = vmul.f32 %v102, %v102
    %v119 = vmul.f32 %v103, %v103
    %v120 = vmul.f32 %v104, %v104
    %v121 = vmul.f32 %v105, %v105
    %v122 = vmul.f32 %v106, %v106
    %v123 = vmul.f32 %v107, %v107
    %v124 = vmul.f32 %v108, %v108
    %v125 = vmul.f32 %v109, %v109
    %v126 = vmul.f32 %v110, %v110
    %v127 = vmul.f32 %v111, %v111
    %v128 = vmul.f32 %v112, %v112
    %129 = vadd.xlane.f32.xlu0 %v113
    %v130 = vpop.xlane.xlu0 %129
    %131 = vadd.xlane.f32.xlu0 %v114
    %v132 = vpop.xlane.xlu0 %131
    %133 = vadd.xlane.f32.xlu0 %v115
    %v134 = vpop.xlane.xlu0 %133
    %135 = vadd.xlane.f32.xlu0 %v116
    %v136 = vpop.xlane.xlu0 %135
    %137 = vadd.xlane.f32.xlu0 %v117
    %v138 = vpop.xlane.xlu0 %137
    %139 = vadd.xlane.f32.xlu0 %v118
    %v140 = vpop.xlane.xlu0 %139
    %141 = vadd.xlane.f32.xlu0 %v119
    %v142 = vpop.xlane.xlu0 %141
    %143 = vadd.xlane.f32.xlu0 %v120
    %v144 = vpop.xlane.xlu0 %143
    %145 = vadd.xlane.f32.xlu0 %v121
    %v146 = vpop.xlane.xlu0 %145
    %147 = vadd.xlane.f32.xlu0 %v122
    %v148 = vpop.xlane.xlu0 %147
    %149 = vadd.xlane.f32.xlu0 %v123
    %v150 = vpop.xlane.xlu0 %149
    %151 = vadd.xlane.f32.xlu0 %v124
    %v152 = vpop.xlane.xlu0 %151
    %153 = vadd.xlane.f32.xlu0 %v125
    %v154 = vpop.xlane.xlu0 %153
    %155 = vadd.xlane.f32.xlu0 %v126
    %v156 = vpop.xlane.xlu0 %155
    %157 = vadd.xlane.f32.xlu0 %v127
    %v158 = vpop.xlane.xlu0 %157
    %159 = vadd.xlane.f32.xlu0 %v128
    %v160 = vpop.xlane.xlu0 %159
    %v177 = vunpack.c.l.b16 %v30
    %v178 = vunpack.c.l.b16 %v31
    %v179 = vunpack.c.l.b16 %v32
    %v180 = vunpack.c.l.b16 %v33
    %v181 = vunpack.c.l.b16 %v34
    %v182 = vunpack.c.l.b16 %v35
    %v183 = vunpack.c.l.b16 %v36
    %v184 = vunpack.c.l.b16 %v37
    %v185 = vunpack.c.l.b16 %v38
    %v186 = vunpack.c.l.b16 %v39
    %v187 = vunpack.c.l.b16 %v40
    %v188 = vunpack.c.l.b16 %v41
    %v189 = vunpack.c.l.b16 %v42
    %v190 = vunpack.c.l.b16 %v43
    %v191 = vunpack.c.l.b16 %v44
    %v192 = vunpack.c.l.b16 %v45
    %v193 = vpack.c.b16 %v178, %v177
    %v194 = vpack.c.b16 %v180, %v179
    %v195 = vpack.c.b16 %v182, %v181
    %v196 = vpack.c.b16 %v184, %v183
    %v197 = vpack.c.b16 %v186, %v185
    %v198 = vpack.c.b16 %v188, %v187
    %v199 = vpack.c.b16 %v190, %v189
    %v200 = vpack.c.b16 %v192, %v191
    %v225 = vunpack.c.l.b16 %v46
    %v226 = vunpack.c.l.b16 %v47
    %v227 = vunpack.c.l.b16 %v48
    %v228 = vunpack.c.l.b16 %v49
    %v229 = vunpack.c.l.b16 %v50
    %v230 = vunpack.c.l.b16 %v51
    %v231 = vunpack.c.l.b16 %v52
    %v232 = vunpack.c.l.b16 %v53
    %v233 = vunpack.c.l.b16 %v54
    %v234 = vunpack.c.l.b16 %v55
    %v235 = vunpack.c.l.b16 %v56
    %v236 = vunpack.c.l.b16 %v57
    %v237 = vunpack.c.l.b16 %v58
    %v238 = vunpack.c.l.b16 %v59
    %v239 = vunpack.c.l.b16 %v60
    %v240 = vunpack.c.l.b16 %v61
    %v241 = vpack.c.b16 %v226, %v225
    %v242 = vpack.c.b16 %v228, %v227
    %v243 = vpack.c.b16 %v230, %v229
    %v244 = vpack.c.b16 %v232, %v231
    %v245 = vpack.c.b16 %v234, %v233
    %v246 = vpack.c.b16 %v236, %v235
    %v247 = vpack.c.b16 %v238, %v237
    %v248 = vpack.c.b16 %v240, %v239
    %257 = vmatpush.bf16.xpose.msra.mxu0 %v248
    %258 = vmatpush.bf16.xpose.msra.mxu0 %v247
    %259 = vmatpush.bf16.xpose.msra.mxu0 %v246
    %260 = vmatpush.bf16.xpose.msra.mxu0 %v245
    %261 = vmatpush.bf16.xpose.msra.mxu0 %v244
    %262 = vmatpush.bf16.xpose.msra.mxu0 %v243
    %263 = vmatpush.bf16.xpose.msra.mxu0 %v242
    %264 = vmatpush.bf16.xpose.msra.mxu0 %v241
    %265 = vmatmul.bf16.gmra.mxu0 %v193
    %v266 = vpop.f32.mrf.mxu0
    %v267 = vadd.f32 0.0, %v266
    %v268 = vpop.f32.mrf.mxu0
    %v269 = vadd.f32 0.0, %v268
    %270 = vmatmul.bf16.gmra.mxu0 %v194
    %v271 = vpop.f32.mrf.mxu0
    %v272 = vadd.f32 0.0, %v271
    %v273 = vpop.f32.mrf.mxu0
    %v274 = vadd.f32 0.0, %v273
    %275 = vmatmul.bf16.gmra.mxu0 %v195
    %v276 = vpop.f32.mrf.mxu0
    %v277 = vadd.f32 0.0, %v276
    %v278 = vpop.f32.mrf.mxu0
    %v279 = vadd.f32 0.0, %v278
    %280 = vmatmul.bf16.gmra.mxu0 %v196
    %v281 = vpop.f32.mrf.mxu0
    %v282 = vadd.f32 0.0, %v281
    %v283 = vpop.f32.mrf.mxu0
    %v284 = vadd.f32 0.0, %v283
    %285 = vmatmul.bf16.gmra.mxu0 %v197
    %v286 = vpop.f32.mrf.mxu0
    %v287 = vadd.f32 0.0, %v286
    %v288 = vpop.f32.mrf.mxu0
    %v289 = vadd.f32 0.0, %v288
    %290 = vmatmul.bf16.gmra.mxu0 %v198
    %v291 = vpop.f32.mrf.mxu0
    %v292 = vadd.f32 0.0, %v291
    %v293 = vpop.f32.mrf.mxu0
    %v294 = vadd.f32 0.0, %v293
    %295 = vmatmul.bf16.gmra.mxu0 %v199
    %v296 = vpop.f32.mrf.mxu0
    %v297 = vadd.f32 0.0, %v296
    %v298 = vpop.f32.mrf.mxu0
    %v299 = vadd.f32 0.0, %v298
    %300 = vmatmul.bf16.gmra.mxu0 %v200
    %v301 = vpop.f32.mrf.mxu0
    %v302 = vadd.f32 0.0, %v301
    %v303 = vpop.f32.mrf.mxu0
    %v304 = vadd.f32 0.0, %v303
    %305 = vdwg.mxu0
    %v306 = vmul.f32 %v267, 2.0
    %v307 = vmul.f32 %v269, 2.0
    %v308 = vmul.f32 %v272, 2.0
    %v309 = vmul.f32 %v274, 2.0
    %v310 = vmul.f32 %v277, 2.0
    %v311 = vmul.f32 %v279, 2.0
    %v312 = vmul.f32 %v282, 2.0
    %v313 = vmul.f32 %v284, 2.0
    %v314 = vmul.f32 %v287, 2.0
    %v315 = vmul.f32 %v289, 2.0
    %v316 = vmul.f32 %v292, 2.0
    %v317 = vmul.f32 %v294, 2.0
    %v318 = vmul.f32 %v297, 2.0
    %v319 = vmul.f32 %v299, 2.0
    %v320 = vmul.f32 %v302, 2.0
    %v321 = vmul.f32 %v304, 2.0
    %v323 = vperm.slane %v62, 0
    %v325 = vsub.f32 %v323, %v306
    %v326 = vsub.f32 %v323, %v307
    %v327 = vsub.f32 %v323, %v308
    %v328 = vsub.f32 %v323, %v309
    %v329 = vsub.f32 %v323, %v310
    %v330 = vsub.f32 %v323, %v311
    %v331 = vsub.f32 %v323, %v312
    %v332 = vsub.f32 %v323, %v313
    %v333 = vsub.f32 %v323, %v314
    %v334 = vsub.f32 %v323, %v315
    %v335 = vsub.f32 %v323, %v316
    %v336 = vsub.f32 %v323, %v317
    %v337 = vsub.f32 %v323, %v318
    %v338 = vsub.f32 %v323, %v319
    %v339 = vsub.f32 %v323, %v320
    %v340 = vsub.f32 %v323, %v321
    %v341 = vadd.f32 %v130, %v325
    %v342 = vadd.f32 %v132, %v326
    %v343 = vadd.f32 %v134, %v327
    %v344 = vadd.f32 %v136, %v328
    %v345 = vadd.f32 %v138, %v329
    %v346 = vadd.f32 %v140, %v330
    %v347 = vadd.f32 %v142, %v331
    %v348 = vadd.f32 %v144, %v332
    %v349 = vadd.f32 %v146, %v333
    %v350 = vadd.f32 %v148, %v334
    %v351 = vadd.f32 %v150, %v335
    %v352 = vadd.f32 %v152, %v336
    %v353 = vadd.f32 %v154, %v337
    %v354 = vadd.f32 %v156, %v338
    %v355 = vadd.f32 %v158, %v339
    %v356 = vadd.f32 %v160, %v340
    %v357 = vmax.f32 %v341, 0.0
    %v358 = vmax.f32 %v342, 0.0
    %v359 = vmax.f32 %v343, 0.0
    %v360 = vmax.f32 %v344, 0.0
    %v361 = vmax.f32 %v345, 0.0
    %v362 = vmax.f32 %v346, 0.0
    %v363 = vmax.f32 %v347, 0.0
    %v364 = vmax.f32 %v348, 0.0
    %v365 = vmax.f32 %v349, 0.0
    %v366 = vmax.f32 %v350, 0.0
    %v367 = vmax.f32 %v351, 0.0
    %v368 = vmax.f32 %v352, 0.0
    %v369 = vmax.f32 %v353, 0.0
    %v370 = vmax.f32 %v354, 0.0
    %v371 = vmax.f32 %v355, 0.0
    %v372 = vmax.f32 %v356, 0.0
    %s373 = smul.u32 0, 128
    %v374 = vlaneseq
    %v375 = vand.u32 %v374, 127
    %v376 = vlaneseq
    %v377 = vshrl.u32 %v376, 7
    %v378 = vadd.s32 %v377, 8
    %v379 = vadd.s32 %v377, 16
    %v380 = vadd.s32 %v377, 24
    %v381 = vadd.s32 %v377, 32
    %v382 = vadd.s32 %v377, 40
    %v383 = vadd.s32 %v377, 48
    %v384 = vadd.s32 %v377, 56
    %v385 = vadd.s32 %v377, 64
    %v386 = vadd.s32 %v377, 72
    %v387 = vadd.s32 %v377, 80
    %v388 = vadd.s32 %v377, 88
    %v389 = vadd.s32 %v377, 96
    %v390 = vadd.s32 %v377, 104
    %v391 = vadd.s32 %v377, 112
    %v392 = vadd.s32 %v377, 120
    %v393 = vstv %s373
    %v394 = vadd.s32 %v393, %v377
    %v395 = vadd.s32 %v393, %v378
    %v396 = vadd.s32 %v393, %v379
    %v397 = vadd.s32 %v393, %v380
    %v398 = vadd.s32 %v393, %v381
    %v399 = vadd.s32 %v393, %v382
    %v400 = vadd.s32 %v393, %v383
    %v401 = vadd.s32 %v393, %v384
    %v402 = vadd.s32 %v393, %v385
    %v403 = vadd.s32 %v393, %v386
    %v404 = vadd.s32 %v393, %v387
    %v405 = vadd.s32 %v393, %v388
    %v406 = vadd.s32 %v393, %v389
    %v407 = vadd.s32 %v393, %v390
    %v408 = vadd.s32 %v393, %v391
    %v409 = vadd.s32 %v393, %v392
    %410 = vset.pattern.permute.xlu0 0
    %411 = vperm.xlu0 %410, %v65
    %v412 = vpop.permute.xlu0 %411
    %413 = vset.pattern.permute.xlu0 0
    %414 = vperm.xlu0 %413, %v66
    %v415 = vpop.permute.xlu0 %414
    %416 = vset.pattern.permute.xlu0 0
    %417 = vperm.xlu0 %416, %v67
    %v418 = vpop.permute.xlu0 %417
    %419 = vset.pattern.permute.xlu0 0
    %420 = vperm.xlu0 %419, %v68
    %v421 = vpop.permute.xlu0 %420
    %422 = vset.pattern.permute.xlu0 0
    %423 = vperm.xlu0 %422, %v69
    %v424 = vpop.permute.xlu0 %423
    %425 = vset.pattern.permute.xlu0 0
    %426 = vperm.xlu0 %425, %v70
    %v427 = vpop.permute.xlu0 %426
    %428 = vset.pattern.permute.xlu0 0
    %429 = vperm.xlu0 %428, %v71
    %v430 = vpop.permute.xlu0 %429
    %431 = vset.pattern.permute.xlu0 0
    %432 = vperm.xlu0 %431, %v72
    %v433 = vpop.permute.xlu0 %432
    %434 = vset.pattern.permute.xlu0 0
    %435 = vperm.xlu0 %434, %v73
    %v436 = vpop.permute.xlu0 %435
    %437 = vset.pattern.permute.xlu0 0
    %438 = vperm.xlu0 %437, %v74
    %v439 = vpop.permute.xlu0 %438
    %440 = vset.pattern.permute.xlu0 0
    %441 = vperm.xlu0 %440, %v75
    %v442 = vpop.permute.xlu0 %441
    %443 = vset.pattern.permute.xlu0 0
    %444 = vperm.xlu0 %443, %v76
    %v445 = vpop.permute.xlu0 %444
    %446 = vset.pattern.permute.xlu0 0
    %447 = vperm.xlu0 %446, %v77
    %v448 = vpop.permute.xlu0 %447
    %449 = vset.pattern.permute.xlu0 0
    %450 = vperm.xlu0 %449, %v78
    %v451 = vpop.permute.xlu0 %450
    %452 = vset.pattern.permute.xlu0 0
    %453 = vperm.xlu0 %452, %v79
    %v454 = vpop.permute.xlu0 %453
    %455 = vset.pattern.permute.xlu0 0
    %456 = vperm.xlu0 %455, %v80
    %v457 = vpop.permute.xlu0 %456
    %v458 = vperm.slane %v63, 0
    %vm459 = vcmp.eq.s32.totalorder %v412, %v458
    %vm460 = vcmp.eq.s32.totalorder %v415, %v458
    %vm461 = vcmp.eq.s32.totalorder %v418, %v458
    %vm462 = vcmp.eq.s32.totalorder %v421, %v458
    %vm463 = vcmp.eq.s32.totalorder %v424, %v458
    %vm464 = vcmp.eq.s32.totalorder %v427, %v458
    %vm465 = vcmp.eq.s32.totalorder %v430, %v458
    %vm466 = vcmp.eq.s32.totalorder %v433, %v458
    %vm467 = vcmp.eq.s32.totalorder %v436, %v458
    %vm468 = vcmp.eq.s32.totalorder %v439, %v458
    %vm469 = vcmp.eq.s32.totalorder %v442, %v458
    %vm470 = vcmp.eq.s32.totalorder %v445, %v458
    %vm471 = vcmp.eq.s32.totalorder %v448, %v458
    %vm472 = vcmp.eq.s32.totalorder %v451, %v458
    %vm473 = vcmp.eq.s32.totalorder %v454, %v458
    %vm474 = vcmp.eq.s32.totalorder %v457, %v458
    %475 = vset.pattern.permute.xlu0 0
    %476 = vperm.xlu0 %475, %v81
    %v477 = vpop.permute.xlu0 %476
    %478 = vset.pattern.permute.xlu0 0
    %479 = vperm.xlu0 %478, %v82
    %v480 = vpop.permute.xlu0 %479
    %481 = vset.pattern.permute.xlu0 0
    %482 = vperm.xlu0 %481, %v83
    %v483 = vpop.permute.xlu0 %482
    %484 = vset.pattern.permute.xlu0 0
    %485 = vperm.xlu0 %484, %v84
    %v486 = vpop.permute.xlu0 %485
    %487 = vset.pattern.permute.xlu0 0
    %488 = vperm.xlu0 %487, %v85
    %v489 = vpop.permute.xlu0 %488
    %490 = vset.pattern.permute.xlu0 0
    %491 = vperm.xlu0 %490, %v86
    %v492 = vpop.permute.xlu0 %491
    %493 = vset.pattern.permute.xlu0 0
    %494 = vperm.xlu0 %493, %v87
    %v495 = vpop.permute.xlu0 %494
    %496 = vset.pattern.permute.xlu0 0
    %497 = vperm.xlu0 %496, %v88
    %v498 = vpop.permute.xlu0 %497
    %499 = vset.pattern.permute.xlu0 0
    %500 = vperm.xlu0 %499, %v89
    %v501 = vpop.permute.xlu0 %500
    %502 = vset.pattern.permute.xlu0 0
    %503 = vperm.xlu0 %502, %v90
    %v504 = vpop.permute.xlu0 %503
    %505 = vset.pattern.permute.xlu0 0
    %506 = vperm.xlu0 %505, %v91
    %v507 = vpop.permute.xlu0 %506
    %508 = vset.pattern.permute.xlu0 0
    %509 = vperm.xlu0 %508, %v92
    %v510 = vpop.permute.xlu0 %509
    %511 = vset.pattern.permute.xlu0 0
    %512 = vperm.xlu0 %511, %v93
    %v513 = vpop.permute.xlu0 %512
    %514 = vset.pattern.permute.xlu0 0
    %515 = vperm.xlu0 %514, %v94
    %v516 = vpop.permute.xlu0 %515
    %517 = vset.pattern.permute.xlu0 0
    %518 = vperm.xlu0 %517, %v95
    %v519 = vpop.permute.xlu0 %518
    %520 = vset.pattern.permute.xlu0 0
    %521 = vperm.xlu0 %520, %v96
    %v522 = vpop.permute.xlu0 %521
    %v523 = vperm.slane %v64, 0
    %vm524 = vcmp.eq.s32.totalorder %v477, %v523
    %vm525 = vcmp.eq.s32.totalorder %v480, %v523
    %vm526 = vcmp.eq.s32.totalorder %v483, %v523
    %vm527 = vcmp.eq.s32.totalorder %v486, %v523
    %vm528 = vcmp.eq.s32.totalorder %v489, %v523
    %vm529 = vcmp.eq.s32.totalorder %v492, %v523
    %vm530 = vcmp.eq.s32.totalorder %v495, %v523
    %vm531 = vcmp.eq.s32.totalorder %v498, %v523
    %vm532 = vcmp.eq.s32.totalorder %v501, %v523
    %vm533 = vcmp.eq.s32.totalorder %v504, %v523
    %vm534 = vcmp.eq.s32.totalorder %v507, %v523
    %vm535 = vcmp.eq.s32.totalorder %v510, %v523
    %vm536 = vcmp.eq.s32.totalorder %v513, %v523
    %vm537 = vcmp.eq.s32.totalorder %v516, %v523
    %vm538 = vcmp.eq.s32.totalorder %v519, %v523
    %vm539 = vcmp.eq.s32.totalorder %v522, %v523
    %vm540 = vcmp.ne.s32.totalorder %v394, %v375
    %vm541 = vcmp.ne.s32.totalorder %v395, %v375
    %vm542 = vcmp.ne.s32.totalorder %v396, %v375
    %vm543 = vcmp.ne.s32.totalorder %v397, %v375
    %vm544 = vcmp.ne.s32.totalorder %v398, %v375
    %vm545 = vcmp.ne.s32.totalorder %v399, %v375
    %vm546 = vcmp.ne.s32.totalorder %v400, %v375
    %vm547 = vcmp.ne.s32.totalorder %v401, %v375
    %vm548 = vcmp.ne.s32.totalorder %v402, %v375
    %vm549 = vcmp.ne.s32.totalorder %v403, %v375
    %vm550 = vcmp.ne.s32.totalorder %v404, %v375
    %vm551 = vcmp.ne.s32.totalorder %v405, %v375
    %vm552 = vcmp.ne.s32.totalorder %v406, %v375
    %vm553 = vcmp.ne.s32.totalorder %v407, %v375
    %vm554 = vcmp.ne.s32.totalorder %v408, %v375
    %vm555 = vcmp.ne.s32.totalorder %v409, %v375
    %vm556 = vmand %vm459, %vm540
    %vm557 = vmand %vm460, %vm541
    %vm558 = vmand %vm461, %vm542
    %vm559 = vmand %vm462, %vm543
    %vm560 = vmand %vm463, %vm544
    %vm561 = vmand %vm464, %vm545
    %vm562 = vmand %vm465, %vm546
    %vm563 = vmand %vm466, %vm547
    %vm564 = vmand %vm467, %vm548
    %vm565 = vmand %vm468, %vm549
    %vm566 = vmand %vm469, %vm550
    %vm567 = vmand %vm470, %vm551
    %vm568 = vmand %vm471, %vm552
    %vm569 = vmand %vm472, %vm553
    %vm570 = vmand %vm473, %vm554
    %vm571 = vmand %vm474, %vm555
    %vm572 = vmxor %vm524, %vm459
    %vm573 = vmxor %vm525, %vm460
    %vm574 = vmxor %vm526, %vm461
    %vm575 = vmxor %vm527, %vm462
    %vm576 = vmxor %vm528, %vm463
    %vm577 = vmxor %vm529, %vm464
    %vm578 = vmxor %vm530, %vm465
    %vm579 = vmxor %vm531, %vm466
    %vm580 = vmxor %vm532, %vm467
    %vm581 = vmxor %vm533, %vm468
    %vm582 = vmxor %vm534, %vm469
    %vm583 = vmxor %vm535, %vm470
    %vm584 = vmxor %vm536, %vm471
    %vm585 = vmxor %vm537, %vm472
    %vm586 = vmxor %vm538, %vm473
    %vm587 = vmxor %vm539, %vm474
    %vm588 = vmxor %vm524, 1
    %vm589 = vmxor %vm525, 1
    %vm590 = vmxor %vm526, 1
    %vm591 = vmxor %vm527, 1
    %vm592 = vmxor %vm528, 1
    %vm593 = vmxor %vm529, 1
    %vm594 = vmxor %vm530, 1
    %vm595 = vmxor %vm531, 1
    %vm596 = vmxor %vm532, 1
    %vm597 = vmxor %vm533, 1
    %vm598 = vmxor %vm534, 1
    %vm599 = vmxor %vm535, 1
    %vm600 = vmxor %vm536, 1
    %vm601 = vmxor %vm537, 1
    %vm602 = vmxor %vm538, 1
    %vm603 = vmxor %vm539, 1
    %v604 = vsel %vm556, %v375, 128
    %v605 = vsel %vm557, %v375, 128
    %v606 = vsel %vm558, %v375, 128
    %v607 = vsel %vm559, %v375, 128
    %v608 = vsel %vm560, %v375, 128
    %v609 = vsel %vm561, %v375, 128
    %v610 = vsel %vm562, %v375, 128
    %v611 = vsel %vm563, %v375, 128
    %v612 = vsel %vm564, %v375, 128
    %v613 = vsel %vm565, %v375, 128
    %v614 = vsel %vm566, %v375, 128
    %v615 = vsel %vm567, %v375, 128
    %v616 = vsel %vm568, %v375, 128
    %v617 = vsel %vm569, %v375, 128
    %v618 = vsel %vm570, %v375, 128
    %v619 = vsel %vm571, %v375, 128
    %v620 = vand.u32 %v604, 65535
    %v621 = vshra.s32 %v604, 16
    %v622 = vcvt.s32.f32 %v620
    %v623 = vcvt.s32.f32 %v621
    %624 = vmin.xlane.f32.xlu0 %v623
    %v625 = vpop.xlane.xlu0 %624
    %vm626 = vcmp.eq.f32.partialorder %v623, %v625
    %v627 = vsel %vm626, %v622, inf
    %628 = vmin.xlane.f32.xlu0 %v627
    %v629 = vpop.xlane.xlu0 %628
    %v630 = vcvt.f32.s32 %v629
    %v631 = vcvt.f32.s32 %v625
    %v632 = vshll.u32 %v631, 16
    %v633 = vadd.s32 %v632, %v630
    %v634 = vand.u32 %v605, 65535
    %v635 = vshra.s32 %v605, 16
    %v636 = vcvt.s32.f32 %v634
    %v637 = vcvt.s32.f32 %v635
    %638 = vmin.xlane.f32.xlu0 %v637
    %v639 = vpop.xlane.xlu0 %638
    %vm640 = vcmp.eq.f32.partialorder %v637, %v639
    %v641 = vsel %vm640, %v636, inf
    %642 = vmin.xlane.f32.xlu0 %v641
    %v643 = vpop.xlane.xlu0 %642
    %v644 = vcvt.f32.s32 %v643
    %v645 = vcvt.f32.s32 %v639
    %v646 = vshll.u32 %v645, 16
    %v647 = vadd.s32 %v646, %v644
    %v648 = vand.u32 %v606, 65535
    %v649 = vshra.s32 %v606, 16
    %v650 = vcvt.s32.f32 %v648
    %v651 = vcvt.s32.f32 %v649
    %652 = vmin.xlane.f32.xlu0 %v651
    %v653 = vpop.xlane.xlu0 %652
    %vm654 = vcmp.eq.f32.partialorder %v651, %v653
    %v655 = vsel %vm654, %v650, inf
    %656 = vmin.xlane.f32.xlu0 %v655
    %v657 = vpop.xlane.xlu0 %656
    %v658 = vcvt.f32.s32 %v657
    %v659 = vcvt.f32.s32 %v653
    %v660 = vshll.u32 %v659, 16
    %v661 = vadd.s32 %v660, %v658
    %v662 = vand.u32 %v607, 65535
    %v663 = vshra.s32 %v607, 16
    %v664 = vcvt.s32.f32 %v662
    %v665 = vcvt.s32.f32 %v663
    %666 = vmin.xlane.f32.xlu0 %v665
    %v667 = vpop.xlane.xlu0 %666
    %vm668 = vcmp.eq.f32.partialorder %v665, %v667
    %v669 = vsel %vm668, %v664, inf
    %670 = vmin.xlane.f32.xlu0 %v669
    %v671 = vpop.xlane.xlu0 %670
    %v672 = vcvt.f32.s32 %v671
    %v673 = vcvt.f32.s32 %v667
    %v674 = vshll.u32 %v673, 16
    %v675 = vadd.s32 %v674, %v672
    %v676 = vand.u32 %v608, 65535
    %v677 = vshra.s32 %v608, 16
    %v678 = vcvt.s32.f32 %v676
    %v679 = vcvt.s32.f32 %v677
    %680 = vmin.xlane.f32.xlu0 %v679
    %v681 = vpop.xlane.xlu0 %680
    %vm682 = vcmp.eq.f32.partialorder %v679, %v681
    %v683 = vsel %vm682, %v678, inf
    %684 = vmin.xlane.f32.xlu0 %v683
    %v685 = vpop.xlane.xlu0 %684
    %v686 = vcvt.f32.s32 %v685
    %v687 = vcvt.f32.s32 %v681
    %v688 = vshll.u32 %v687, 16
    %v689 = vadd.s32 %v688, %v686
    %v690 = vand.u32 %v609, 65535
    %v691 = vshra.s32 %v609, 16
    %v692 = vcvt.s32.f32 %v690
    %v693 = vcvt.s32.f32 %v691
    %694 = vmin.xlane.f32.xlu0 %v693
    %v695 = vpop.xlane.xlu0 %694
    %vm696 = vcmp.eq.f32.partialorder %v693, %v695
    %v697 = vsel %vm696, %v692, inf
    %698 = vmin.xlane.f32.xlu0 %v697
    %v699 = vpop.xlane.xlu0 %698
    %v700 = vcvt.f32.s32 %v699
    %v701 = vcvt.f32.s32 %v695
    %v702 = vshll.u32 %v701, 16
    %v703 = vadd.s32 %v702, %v700
    %v704 = vand.u32 %v610, 65535
    %v705 = vshra.s32 %v610, 16
    %v706 = vcvt.s32.f32 %v704
    %v707 = vcvt.s32.f32 %v705
    %708 = vmin.xlane.f32.xlu0 %v707
    %v709 = vpop.xlane.xlu0 %708
    %vm710 = vcmp.eq.f32.partialorder %v707, %v709
    %v711 = vsel %vm710, %v706, inf
    %712 = vmin.xlane.f32.xlu0 %v711
    %v713 = vpop.xlane.xlu0 %712
    %v714 = vcvt.f32.s32 %v713
    %v715 = vcvt.f32.s32 %v709
    %v716 = vshll.u32 %v715, 16
    %v717 = vadd.s32 %v716, %v714
    %v718 = vand.u32 %v611, 65535
    %v719 = vshra.s32 %v611, 16
    %v720 = vcvt.s32.f32 %v718
    %v721 = vcvt.s32.f32 %v719
    %722 = vmin.xlane.f32.xlu0 %v721
    %v723 = vpop.xlane.xlu0 %722
    %vm724 = vcmp.eq.f32.partialorder %v721, %v723
    %v725 = vsel %vm724, %v720, inf
    %726 = vmin.xlane.f32.xlu0 %v725
    %v727 = vpop.xlane.xlu0 %726
    %v728 = vcvt.f32.s32 %v727
    %v729 = vcvt.f32.s32 %v723
    %v730 = vshll.u32 %v729, 16
    %v731 = vadd.s32 %v730, %v728
    %v732 = vand.u32 %v612, 65535
    %v733 = vshra.s32 %v612, 16
    %v734 = vcvt.s32.f32 %v732
    %v735 = vcvt.s32.f32 %v733
    %736 = vmin.xlane.f32.xlu0 %v735
    %v737 = vpop.xlane.xlu0 %736
    %vm738 = vcmp.eq.f32.partialorder %v735, %v737
    %v739 = vsel %vm738, %v734, inf
    %740 = vmin.xlane.f32.xlu0 %v739
    %v741 = vpop.xlane.xlu0 %740
    %v742 = vcvt.f32.s32 %v741
    %v743 = vcvt.f32.s32 %v737
    %v744 = vshll.u32 %v743, 16
    %v745 = vadd.s32 %v744, %v742
    %v746 = vand.u32 %v613, 65535
    %v747 = vshra.s32 %v613, 16
    %v748 = vcvt.s32.f32 %v746
    %v749 = vcvt.s32.f32 %v747
    %750 = vmin.xlane.f32.xlu0 %v749
    %v751 = vpop.xlane.xlu0 %750
    %vm752 = vcmp.eq.f32.partialorder %v749, %v751
    %v753 = vsel %vm752, %v748, inf
    %754 = vmin.xlane.f32.xlu0 %v753
    %v755 = vpop.xlane.xlu0 %754
    %v756 = vcvt.f32.s32 %v755
    %v757 = vcvt.f32.s32 %v751
    %v758 = vshll.u32 %v757, 16
    %v759 = vadd.s32 %v758, %v756
    %v760 = vand.u32 %v614, 65535
    %v761 = vshra.s32 %v614, 16
    %v762 = vcvt.s32.f32 %v760
    %v763 = vcvt.s32.f32 %v761
    %764 = vmin.xlane.f32.xlu0 %v763
    %v765 = vpop.xlane.xlu0 %764
    %vm766 = vcmp.eq.f32.partialorder %v763, %v765
    %v767 = vsel %vm766, %v762, inf
    %768 = vmin.xlane.f32.xlu0 %v767
    %v769 = vpop.xlane.xlu0 %768
    %v770 = vcvt.f32.s32 %v769
    %v771 = vcvt.f32.s32 %v765
    %v772 = vshll.u32 %v771, 16
    %v773 = vadd.s32 %v772, %v770
    %v774 = vand.u32 %v615, 65535
    %v775 = vshra.s32 %v615, 16
    %v776 = vcvt.s32.f32 %v774
    %v777 = vcvt.s32.f32 %v775
    %778 = vmin.xlane.f32.xlu0 %v777
    %v779 = vpop.xlane.xlu0 %778
    %vm780 = vcmp.eq.f32.partialorder %v777, %v779
    %v781 = vsel %vm780, %v776, inf
    %782 = vmin.xlane.f32.xlu0 %v781
    %v783 = vpop.xlane.xlu0 %782
    %v784 = vcvt.f32.s32 %v783
    %v785 = vcvt.f32.s32 %v779
    %v786 = vshll.u32 %v785, 16
    %v787 = vadd.s32 %v786, %v784
    %v788 = vand.u32 %v616, 65535
    %v789 = vshra.s32 %v616, 16
    %v790 = vcvt.s32.f32 %v788
    %v791 = vcvt.s32.f32 %v789
    %792 = vmin.xlane.f32.xlu0 %v791
    %v793 = vpop.xlane.xlu0 %792
    %vm794 = vcmp.eq.f32.partialorder %v791, %v793
    %v795 = vsel %vm794, %v790, inf
    %796 = vmin.xlane.f32.xlu0 %v795
    %v797 = vpop.xlane.xlu0 %796
    %v798 = vcvt.f32.s32 %v797
    %v799 = vcvt.f32.s32 %v793
    %v800 = vshll.u32 %v799, 16
    %v801 = vadd.s32 %v800, %v798
    %v802 = vand.u32 %v617, 65535
    %v803 = vshra.s32 %v617, 16
    %v804 = vcvt.s32.f32 %v802
    %v805 = vcvt.s32.f32 %v803
    %806 = vmin.xlane.f32.xlu0 %v805
    %v807 = vpop.xlane.xlu0 %806
    %vm808 = vcmp.eq.f32.partialorder %v805, %v807
    %v809 = vsel %vm808, %v804, inf
    %810 = vmin.xlane.f32.xlu0 %v809
    %v811 = vpop.xlane.xlu0 %810
    %v812 = vcvt.f32.s32 %v811
    %v813 = vcvt.f32.s32 %v807
    %v814 = vshll.u32 %v813, 16
    %v815 = vadd.s32 %v814, %v812
    %v816 = vand.u32 %v618, 65535
    %v817 = vshra.s32 %v618, 16
    %v818 = vcvt.s32.f32 %v816
    %v819 = vcvt.s32.f32 %v817
    %820 = vmin.xlane.f32.xlu0 %v819
    %v821 = vpop.xlane.xlu0 %820
    %vm822 = vcmp.eq.f32.partialorder %v819, %v821
    %v823 = vsel %vm822, %v818, inf
    %824 = vmin.xlane.f32.xlu0 %v823
    %v825 = vpop.xlane.xlu0 %824
    %v826 = vcvt.f32.s32 %v825
    %v827 = vcvt.f32.s32 %v821
    %v828 = vshll.u32 %v827, 16
    %v829 = vadd.s32 %v828, %v826
    %v830 = vand.u32 %v619, 65535
    %v831 = vshra.s32 %v619, 16
    %v832 = vcvt.s32.f32 %v830
    %v833 = vcvt.s32.f32 %v831
    %834 = vmin.xlane.f32.xlu0 %v833
    %v835 = vpop.xlane.xlu0 %834
    %vm836 = vcmp.eq.f32.partialorder %v833, %v835
    %v837 = vsel %vm836, %v832, inf
    %838 = vmin.xlane.f32.xlu0 %v837
    %v839 = vpop.xlane.xlu0 %838
    %v840 = vcvt.f32.s32 %v839
    %v841 = vcvt.f32.s32 %v835
    %v842 = vshll.u32 %v841, 16
    %v843 = vadd.s32 %v842, %v840
    %vm844 = vcmp.lt.s32.totalorder %v633, 128
    %vm845 = vcmp.lt.s32.totalorder %v647, 128
    %vm846 = vcmp.lt.s32.totalorder %v661, 128
    %vm847 = vcmp.lt.s32.totalorder %v675, 128
    %vm848 = vcmp.lt.s32.totalorder %v689, 128
    %vm849 = vcmp.lt.s32.totalorder %v703, 128
    %vm850 = vcmp.lt.s32.totalorder %v717, 128
    %vm851 = vcmp.lt.s32.totalorder %v731, 128
    %vm852 = vcmp.lt.s32.totalorder %v745, 128
    %vm853 = vcmp.lt.s32.totalorder %v759, 128
    %vm854 = vcmp.lt.s32.totalorder %v773, 128
    %vm855 = vcmp.lt.s32.totalorder %v787, 128
    %vm856 = vcmp.lt.s32.totalorder %v801, 128
    %vm857 = vcmp.lt.s32.totalorder %v815, 128
    %vm858 = vcmp.lt.s32.totalorder %v829, 128
    %vm859 = vcmp.lt.s32.totalorder %v843, 128
    %vm860 = vcmp.eq.s32.totalorder %v375, %v633
    %vm861 = vcmp.eq.s32.totalorder %v375, %v647
    %vm862 = vcmp.eq.s32.totalorder %v375, %v661
    %vm863 = vcmp.eq.s32.totalorder %v375, %v675
    %vm864 = vcmp.eq.s32.totalorder %v375, %v689
    %vm865 = vcmp.eq.s32.totalorder %v375, %v703
    %vm866 = vcmp.eq.s32.totalorder %v375, %v717
    %vm867 = vcmp.eq.s32.totalorder %v375, %v731
    %vm868 = vcmp.eq.s32.totalorder %v375, %v745
    %vm869 = vcmp.eq.s32.totalorder %v375, %v759
    %vm870 = vcmp.eq.s32.totalorder %v375, %v773
    %vm871 = vcmp.eq.s32.totalorder %v375, %v787
    %vm872 = vcmp.eq.s32.totalorder %v375, %v801
    %vm873 = vcmp.eq.s32.totalorder %v375, %v815
    %vm874 = vcmp.eq.s32.totalorder %v375, %v829
    %vm875 = vcmp.eq.s32.totalorder %v375, %v843
    %v876 = vsel %vm860, %v357, 0.0
    %v877 = vsel %vm861, %v358, 0.0
    %v878 = vsel %vm862, %v359, 0.0
    %v879 = vsel %vm863, %v360, 0.0
    %v880 = vsel %vm864, %v361, 0.0
    %v881 = vsel %vm865, %v362, 0.0
    %v882 = vsel %vm866, %v363, 0.0
    %v883 = vsel %vm867, %v364, 0.0
    %v884 = vsel %vm868, %v365, 0.0
    %v885 = vsel %vm869, %v366, 0.0
    %v886 = vsel %vm870, %v367, 0.0
    %v887 = vsel %vm871, %v368, 0.0
    %v888 = vsel %vm872, %v369, 0.0
    %v889 = vsel %vm873, %v370, 0.0
    %v890 = vsel %vm874, %v371, 0.0
    %v891 = vsel %vm875, %v372, 0.0
    %892 = vadd.xlane.f32.xlu0 %v876
    %v893 = vpop.xlane.xlu0 %892
    %894 = vadd.xlane.f32.xlu0 %v877
    %v895 = vpop.xlane.xlu0 %894
    %896 = vadd.xlane.f32.xlu0 %v878
    %v897 = vpop.xlane.xlu0 %896
    %898 = vadd.xlane.f32.xlu0 %v879
    %v899 = vpop.xlane.xlu0 %898
    %900 = vadd.xlane.f32.xlu0 %v880
    %v901 = vpop.xlane.xlu0 %900
    %902 = vadd.xlane.f32.xlu0 %v881
    %v903 = vpop.xlane.xlu0 %902
    %904 = vadd.xlane.f32.xlu0 %v882
    %v905 = vpop.xlane.xlu0 %904
    %906 = vadd.xlane.f32.xlu0 %v883
    %v907 = vpop.xlane.xlu0 %906
    %908 = vadd.xlane.f32.xlu0 %v884
    %v909 = vpop.xlane.xlu0 %908
    %910 = vadd.xlane.f32.xlu0 %v885
    %v911 = vpop.xlane.xlu0 %910
    %912 = vadd.xlane.f32.xlu0 %v886
    %v913 = vpop.xlane.xlu0 %912
    %914 = vadd.xlane.f32.xlu0 %v887
    %v915 = vpop.xlane.xlu0 %914
    %916 = vadd.xlane.f32.xlu0 %v888
    %v917 = vpop.xlane.xlu0 %916
    %918 = vadd.xlane.f32.xlu0 %v889
    %v919 = vpop.xlane.xlu0 %918
    %920 = vadd.xlane.f32.xlu0 %v890
    %v921 = vpop.xlane.xlu0 %920
    %922 = vadd.xlane.f32.xlu0 %v891
    %v923 = vpop.xlane.xlu0 %922
    %v924 = vadd.f32 %v893, 0.1
    %v925 = vadd.f32 %v895, 0.1
    %v926 = vadd.f32 %v897, 0.1
    %v927 = vadd.f32 %v899, 0.1
    %v928 = vadd.f32 %v901, 0.1
    %v929 = vadd.f32 %v903, 0.1
    %v930 = vadd.f32 %v905, 0.1
    %v931 = vadd.f32 %v907, 0.1
    %v932 = vadd.f32 %v909, 0.1
    %v933 = vadd.f32 %v911, 0.1
    %v934 = vadd.f32 %v913, 0.1
    %v935 = vadd.f32 %v915, 0.1
    %v936 = vadd.f32 %v917, 0.1
    %v937 = vadd.f32 %v919, 0.1
    %v938 = vadd.f32 %v921, 0.1
    %v939 = vadd.f32 %v923, 0.1
    %v940 = vsub.f32 %v924, %v357
    %v941 = vsub.f32 %v925, %v358
    %v942 = vsub.f32 %v926, %v359
    %v943 = vsub.f32 %v927, %v360
    %v944 = vsub.f32 %v928, %v361
    %v945 = vsub.f32 %v929, %v362
    %v946 = vsub.f32 %v930, %v363
    %v947 = vsub.f32 %v931, %v364
    %v948 = vsub.f32 %v932, %v365
    %v949 = vsub.f32 %v933, %v366
    %v950 = vsub.f32 %v934, %v367
    %v951 = vsub.f32 %v935, %v368
    %v952 = vsub.f32 %v936, %v369
    %v953 = vsub.f32 %v937, %v370
    %v954 = vsub.f32 %v938, %v371
    %v955 = vsub.f32 %v939, %v372
    %v956 = vmax.f32 %v940, 0.0
    %v957 = vmax.f32 %v941, 0.0
    %v958 = vmax.f32 %v942, 0.0
    %v959 = vmax.f32 %v943, 0.0
    %v960 = vmax.f32 %v944, 0.0
    %v961 = vmax.f32 %v945, 0.0
    %v962 = vmax.f32 %v946, 0.0
    %v963 = vmax.f32 %v947, 0.0
    %v964 = vmax.f32 %v948, 0.0
    %v965 = vmax.f32 %v949, 0.0
    %v966 = vmax.f32 %v950, 0.0
    %v967 = vmax.f32 %v951, 0.0
    %v968 = vmax.f32 %v952, 0.0
    %v969 = vmax.f32 %v953, 0.0
    %v970 = vmax.f32 %v954, 0.0
    %v971 = vmax.f32 %v955, 0.0
    %v972 = vsel %vm572, %v956, -1.0
    %v973 = vsel %vm573, %v957, -1.0
    %v974 = vsel %vm574, %v958, -1.0
    %v975 = vsel %vm575, %v959, -1.0
    %v976 = vsel %vm576, %v960, -1.0
    %v977 = vsel %vm577, %v961, -1.0
    %v978 = vsel %vm578, %v962, -1.0
    %v979 = vsel %vm579, %v963, -1.0
    %v980 = vsel %vm580, %v964, -1.0
    %v981 = vsel %vm581, %v965, -1.0
    %v982 = vsel %vm582, %v966, -1.0
    %v983 = vsel %vm583, %v967, -1.0
    %v984 = vsel %vm584, %v968, -1.0
    %v985 = vsel %vm585, %v969, -1.0
    %v986 = vsel %vm586, %v970, -1.0
    %v987 = vsel %vm587, %v971, -1.0
    %988 = vmax.xlane.f32.xlu0 %v972
    %v989 = vpop.xlane.xlu0 %988
    %990 = vmax.xlane.f32.xlu0 %v973
    %v991 = vpop.xlane.xlu0 %990
    %992 = vmax.xlane.f32.xlu0 %v974
    %v993 = vpop.xlane.xlu0 %992
    %994 = vmax.xlane.f32.xlu0 %v975
    %v995 = vpop.xlane.xlu0 %994
    %996 = vmax.xlane.f32.xlu0 %v976
    %v997 = vpop.xlane.xlu0 %996
    %998 = vmax.xlane.f32.xlu0 %v977
    %v999 = vpop.xlane.xlu0 %998
    %1000 = vmax.xlane.f32.xlu0 %v978
    %v1001 = vpop.xlane.xlu0 %1000
    %1002 = vmax.xlane.f32.xlu0 %v979
    %v1003 = vpop.xlane.xlu0 %1002
    %1004 = vmax.xlane.f32.xlu0 %v980
    %v1005 = vpop.xlane.xlu0 %1004
    %1006 = vmax.xlane.f32.xlu0 %v981
    %v1007 = vpop.xlane.xlu0 %1006
    %1008 = vmax.xlane.f32.xlu0 %v982
    %v1009 = vpop.xlane.xlu0 %1008
    %1010 = vmax.xlane.f32.xlu0 %v983
    %v1011 = vpop.xlane.xlu0 %1010
    %1012 = vmax.xlane.f32.xlu0 %v984
    %v1013 = vpop.xlane.xlu0 %1012
    %1014 = vmax.xlane.f32.xlu0 %v985
    %v1015 = vpop.xlane.xlu0 %1014
    %1016 = vmax.xlane.f32.xlu0 %v986
    %v1017 = vpop.xlane.xlu0 %1016
    %1018 = vmax.xlane.f32.xlu0 %v987
    %v1019 = vpop.xlane.xlu0 %1018
    %v1020 = vsub.f32 0.15, %v989
    %v1021 = vsub.f32 0.15, %v991
    %v1022 = vsub.f32 0.15, %v993
    %v1023 = vsub.f32 0.15, %v995
    %v1024 = vsub.f32 0.15, %v997
    %v1025 = vsub.f32 0.15, %v999
    %v1026 = vsub.f32 0.15, %v1001
    %v1027 = vsub.f32 0.15, %v1003
    %v1028 = vsub.f32 0.15, %v1005
    %v1029 = vsub.f32 0.15, %v1007
    %v1030 = vsub.f32 0.15, %v1009
    %v1031 = vsub.f32 0.15, %v1011
    %v1032 = vsub.f32 0.15, %v1013
    %v1033 = vsub.f32 0.15, %v1015
    %v1034 = vsub.f32 0.15, %v1017
    %v1035 = vsub.f32 0.15, %v1019
    %v1036 = vadd.f32 %v940, %v1020
    %v1037 = vadd.f32 %v941, %v1021
    %v1038 = vadd.f32 %v942, %v1022
    %v1039 = vadd.f32 %v943, %v1023
    %v1040 = vadd.f32 %v944, %v1024
    %v1041 = vadd.f32 %v945, %v1025
    %v1042 = vadd.f32 %v946, %v1026
    %v1043 = vadd.f32 %v947, %v1027
    %v1044 = vadd.f32 %v948, %v1028
    %v1045 = vadd.f32 %v949, %v1029
    %v1046 = vadd.f32 %v950, %v1030
    %v1047 = vadd.f32 %v951, %v1031
    %v1048 = vadd.f32 %v952, %v1032
    %v1049 = vadd.f32 %v953, %v1033
    %v1050 = vadd.f32 %v954, %v1034
    %v1051 = vadd.f32 %v955, %v1035
    %v1052 = vmax.f32 %v1036, 0.0
    %v1053 = vmax.f32 %v1037, 0.0
    %v1054 = vmax.f32 %v1038, 0.0
    %v1055 = vmax.f32 %v1039, 0.0
    %v1056 = vmax.f32 %v1040, 0.0
    %v1057 = vmax.f32 %v1041, 0.0
    %v1058 = vmax.f32 %v1042, 0.0
    %v1059 = vmax.f32 %v1043, 0.0
    %v1060 = vmax.f32 %v1044, 0.0
    %v1061 = vmax.f32 %v1045, 0.0
    %v1062 = vmax.f32 %v1046, 0.0
    %v1063 = vmax.f32 %v1047, 0.0
    %v1064 = vmax.f32 %v1048, 0.0
    %v1065 = vmax.f32 %v1049, 0.0
    %v1066 = vmax.f32 %v1050, 0.0
    %v1067 = vmax.f32 %v1051, 0.0
    %v1068 = vsel %vm588, %v1052, -1.0
    %v1069 = vsel %vm589, %v1053, -1.0
    %v1070 = vsel %vm590, %v1054, -1.0
    %v1071 = vsel %vm591, %v1055, -1.0
    %v1072 = vsel %vm592, %v1056, -1.0
    %v1073 = vsel %vm593, %v1057, -1.0
    %v1074 = vsel %vm594, %v1058, -1.0
    %v1075 = vsel %vm595, %v1059, -1.0
    %v1076 = vsel %vm596, %v1060, -1.0
    %v1077 = vsel %vm597, %v1061, -1.0
    %v1078 = vsel %vm598, %v1062, -1.0
    %v1079 = vsel %vm599, %v1063, -1.0
    %v1080 = vsel %vm600, %v1064, -1.0
    %v1081 = vsel %vm601, %v1065, -1.0
    %v1082 = vsel %vm602, %v1066, -1.0
    %v1083 = vsel %vm603, %v1067, -1.0
    %1084 = vmax.xlane.f32.xlu0 %v1068
    %v1085 = vpop.xlane.xlu0 %1084
    %1086 = vmax.xlane.f32.xlu0 %v1069
    %v1087 = vpop.xlane.xlu0 %1086
    %1088 = vmax.xlane.f32.xlu0 %v1070
    %v1089 = vpop.xlane.xlu0 %1088
    %1090 = vmax.xlane.f32.xlu0 %v1071
    %v1091 = vpop.xlane.xlu0 %1090
    %1092 = vmax.xlane.f32.xlu0 %v1072
    %v1093 = vpop.xlane.xlu0 %1092
    %1094 = vmax.xlane.f32.xlu0 %v1073
    %v1095 = vpop.xlane.xlu0 %1094
    %1096 = vmax.xlane.f32.xlu0 %v1074
    %v1097 = vpop.xlane.xlu0 %1096
    %1098 = vmax.xlane.f32.xlu0 %v1075
    %v1099 = vpop.xlane.xlu0 %1098
    %1100 = vmax.xlane.f32.xlu0 %v1076
    %v1101 = vpop.xlane.xlu0 %1100
    %1102 = vmax.xlane.f32.xlu0 %v1077
    %v1103 = vpop.xlane.xlu0 %1102
    %1104 = vmax.xlane.f32.xlu0 %v1078
    %v1105 = vpop.xlane.xlu0 %1104
    %1106 = vmax.xlane.f32.xlu0 %v1079
    %v1107 = vpop.xlane.xlu0 %1106
    %1108 = vmax.xlane.f32.xlu0 %v1080
    %v1109 = vpop.xlane.xlu0 %1108
    %1110 = vmax.xlane.f32.xlu0 %v1081
    %v1111 = vpop.xlane.xlu0 %1110
    %1112 = vmax.xlane.f32.xlu0 %v1082
    %v1113 = vpop.xlane.xlu0 %1112
    %1114 = vmax.xlane.f32.xlu0 %v1083
    %v1115 = vpop.xlane.xlu0 %1114
    %vm1116 = vcmp.ge.s32.totalorder %v65, 0
    %vm1117 = vcmp.ge.s32.totalorder %v66, 0
    %vm1118 = vcmp.ge.s32.totalorder %v67, 0
    %vm1119 = vcmp.ge.s32.totalorder %v68, 0
    %vm1120 = vcmp.ge.s32.totalorder %v69, 0
    %vm1121 = vcmp.ge.s32.totalorder %v70, 0
    %vm1122 = vcmp.ge.s32.totalorder %v71, 0
    %vm1123 = vcmp.ge.s32.totalorder %v72, 0
    %vm1124 = vcmp.ge.s32.totalorder %v73, 0
    %vm1125 = vcmp.ge.s32.totalorder %v74, 0
    %vm1126 = vcmp.ge.s32.totalorder %v75, 0
    %vm1127 = vcmp.ge.s32.totalorder %v76, 0
    %vm1128 = vcmp.ge.s32.totalorder %v77, 0
    %vm1129 = vcmp.ge.s32.totalorder %v78, 0
    %vm1130 = vcmp.ge.s32.totalorder %v79, 0
    %vm1131 = vcmp.ge.s32.totalorder %v80, 0
    %vm1132 = vmand %vm1116, %vm844
    %vm1133 = vmand %vm1117, %vm845
    %vm1134 = vmand %vm1118, %vm846
    %vm1135 = vmand %vm1119, %vm847
    %vm1136 = vmand %vm1120, %vm848
    %vm1137 = vmand %vm1121, %vm849
    %vm1138 = vmand %vm1122, %vm850
    %vm1139 = vmand %vm1123, %vm851
    %vm1140 = vmand %vm1124, %vm852
    %vm1141 = vmand %vm1125, %vm853
    %vm1142 = vmand %vm1126, %vm854
    %vm1143 = vmand %vm1127, %vm855
    %vm1144 = vmand %vm1128, %vm856
    %vm1145 = vmand %vm1129, %vm857
    %vm1146 = vmand %vm1130, %vm858
    %vm1147 = vmand %vm1131, %vm859
    %vm1148 = vcmp.gt.f32.partialorder %v989, 0.0
    %vm1149 = vcmp.gt.f32.partialorder %v991, 0.0
    %vm1150 = vcmp.gt.f32.partialorder %v993, 0.0
    %vm1151 = vcmp.gt.f32.partialorder %v995, 0.0
    %vm1152 = vcmp.gt.f32.partialorder %v997, 0.0
    %vm1153 = vcmp.gt.f32.partialorder %v999, 0.0
    %vm1154 = vcmp.gt.f32.partialorder %v1001, 0.0
    %vm1155 = vcmp.gt.f32.partialorder %v1003, 0.0
    %vm1156 = vcmp.gt.f32.partialorder %v1005, 0.0
    %vm1157 = vcmp.gt.f32.partialorder %v1007, 0.0
    %vm1158 = vcmp.gt.f32.partialorder %v1009, 0.0
    %vm1159 = vcmp.gt.f32.partialorder %v1011, 0.0
    %vm1160 = vcmp.gt.f32.partialorder %v1013, 0.0
    %vm1161 = vcmp.gt.f32.partialorder %v1015, 0.0
    %vm1162 = vcmp.gt.f32.partialorder %v1017, 0.0
    %vm1163 = vcmp.gt.f32.partialorder %v1019, 0.0
    %vm1164 = vmand %vm1132, %vm1148
    %vm1165 = vmand %vm1133, %vm1149
    %vm1166 = vmand %vm1134, %vm1150
    %vm1167 = vmand %vm1135, %vm1151
    %vm1168 = vmand %vm1136, %vm1152
    %vm1169 = vmand %vm1137, %vm1153
    %vm1170 = vmand %vm1138, %vm1154
    %vm1171 = vmand %vm1139, %vm1155
    %vm1172 = vmand %vm1140, %vm1156
    %vm1173 = vmand %vm1141, %vm1157
    %vm1174 = vmand %vm1142, %vm1158
    %vm1175 = vmand %vm1143, %vm1159
    %vm1176 = vmand %vm1144, %vm1160
    %vm1177 = vmand %vm1145, %vm1161
    %vm1178 = vmand %vm1146, %vm1162
    %vm1179 = vmand %vm1147, %vm1163
    %vm1180 = vcmp.gt.f32.partialorder %v1085, 0.0
    %vm1181 = vcmp.gt.f32.partialorder %v1087, 0.0
    %vm1182 = vcmp.gt.f32.partialorder %v1089, 0.0
    %vm1183 = vcmp.gt.f32.partialorder %v1091, 0.0
    %vm1184 = vcmp.gt.f32.partialorder %v1093, 0.0
    %vm1185 = vcmp.gt.f32.partialorder %v1095, 0.0
    %vm1186 = vcmp.gt.f32.partialorder %v1097, 0.0
    %vm1187 = vcmp.gt.f32.partialorder %v1099, 0.0
    %vm1188 = vcmp.gt.f32.partialorder %v1101, 0.0
    %vm1189 = vcmp.gt.f32.partialorder %v1103, 0.0
    %vm1190 = vcmp.gt.f32.partialorder %v1105, 0.0
    %vm1191 = vcmp.gt.f32.partialorder %v1107, 0.0
    %vm1192 = vcmp.gt.f32.partialorder %v1109, 0.0
    %vm1193 = vcmp.gt.f32.partialorder %v1111, 0.0
    %vm1194 = vcmp.gt.f32.partialorder %v1113, 0.0
    %vm1195 = vcmp.gt.f32.partialorder %v1115, 0.0
    %vm1196 = vmand %vm1164, %vm1180
    %vm1197 = vmand %vm1165, %vm1181
    %vm1198 = vmand %vm1166, %vm1182
    %vm1199 = vmand %vm1167, %vm1183
    %vm1200 = vmand %vm1168, %vm1184
    %vm1201 = vmand %vm1169, %vm1185
    %vm1202 = vmand %vm1170, %vm1186
    %vm1203 = vmand %vm1171, %vm1187
    %vm1204 = vmand %vm1172, %vm1188
    %vm1205 = vmand %vm1173, %vm1189
    %vm1206 = vmand %vm1174, %vm1190
    %vm1207 = vmand %vm1175, %vm1191
    %vm1208 = vmand %vm1176, %vm1192
    %vm1209 = vmand %vm1177, %vm1193
    %vm1210 = vmand %vm1178, %vm1194
    %vm1211 = vmand %vm1179, %vm1195
    %v1212 = vadd.f32 %v989, %v1085
    %v1213 = vadd.f32 %v991, %v1087
    %v1214 = vadd.f32 %v993, %v1089
    %v1215 = vadd.f32 %v995, %v1091
    %v1216 = vadd.f32 %v997, %v1093
    %v1217 = vadd.f32 %v999, %v1095
    %v1218 = vadd.f32 %v1001, %v1097
    %v1219 = vadd.f32 %v1003, %v1099
    %v1220 = vadd.f32 %v1005, %v1101
    %v1221 = vadd.f32 %v1007, %v1103
    %v1222 = vadd.f32 %v1009, %v1105
    %v1223 = vadd.f32 %v1011, %v1107
    %v1224 = vadd.f32 %v1013, %v1109
    %v1225 = vadd.f32 %v1015, %v1111
    %v1226 = vadd.f32 %v1017, %v1113
    %v1227 = vadd.f32 %v1019, %v1115
    %v1228 = vsel %vm1196, %v1212, 0.0
    %v1229 = vsel %vm1197, %v1213, 0.0
    %v1230 = vsel %vm1198, %v1214, 0.0
    %v1231 = vsel %vm1199, %v1215, 0.0
    %v1232 = vsel %vm1200, %v1216, 0.0
    %v1233 = vsel %vm1201, %v1217, 0.0
    %v1234 = vsel %vm1202, %v1218, 0.0
    %v1235 = vsel %vm1203, %v1219, 0.0
    %v1236 = vsel %vm1204, %v1220, 0.0
    %v1237 = vsel %vm1205, %v1221, 0.0
    %v1238 = vsel %vm1206, %v1222, 0.0
    %v1239 = vsel %vm1207, %v1223, 0.0
    %v1240 = vsel %vm1208, %v1224, 0.0
    %v1241 = vsel %vm1209, %v1225, 0.0
    %v1242 = vsel %vm1210, %v1226, 0.0
    %v1243 = vsel %vm1211, %v1227, 0.0
    %vm1244 = vcmask 7168
    %v1245 = vsel %vm1244, %v1228, 0.0
    %v1246 = vsel %vm1244, %v1229, 0.0
    %v1247 = vadd.f32 %v1245, %v1246
    %v1248 = vsel %vm1244, %v1230, 0.0
    %v1249 = vadd.f32 %v1247, %v1248
    %v1250 = vsel %vm1244, %v1231, 0.0
    %v1251 = vadd.f32 %v1249, %v1250
    %v1252 = vsel %vm1244, %v1232, 0.0
    %v1253 = vadd.f32 %v1251, %v1252
    %v1254 = vsel %vm1244, %v1233, 0.0
    %v1255 = vadd.f32 %v1253, %v1254
    %v1256 = vsel %vm1244, %v1234, 0.0
    %v1257 = vadd.f32 %v1255, %v1256
    %v1258 = vsel %vm1244, %v1235, 0.0
    %v1259 = vadd.f32 %v1257, %v1258
    %v1260 = vsel %vm1244, %v1236, 0.0
    %v1261 = vadd.f32 %v1259, %v1260
    %v1262 = vsel %vm1244, %v1237, 0.0
    %v1263 = vadd.f32 %v1261, %v1262
    %v1264 = vsel %vm1244, %v1238, 0.0
    %v1265 = vadd.f32 %v1263, %v1264
    %v1266 = vsel %vm1244, %v1239, 0.0
    %v1267 = vadd.f32 %v1265, %v1266
    %v1268 = vsel %vm1244, %v1240, 0.0
    %v1269 = vadd.f32 %v1267, %v1268
    %v1270 = vsel %vm1244, %v1241, 0.0
    %v1271 = vadd.f32 %v1269, %v1270
    %v1272 = vsel %vm1244, %v1242, 0.0
    %v1273 = vadd.f32 %v1271, %v1272
    %v1274 = vsel %vm1244, %v1243, 0.0
    %v1275 = vadd.f32 %v1273, %v1274
    %1276 = vadd.xlane.f32.xlu0 %v1275
    %v1277 = vpop.xlane.xlu0 %1276
    %v1278 = vrot.slane %v1277, 4
    %v1279 = vadd.f32 %v1277, %v1278
    %v1280 = vrot.slane %v1279, 2
    %v1281 = vadd.f32 %v1279, %v1280
    %v1282 = vrot.slane %v1281, 1
    %v1283 = vadd.f32 %v1281, %v1282
    %s1284 = vtos %v1283
    %v1285 = vstv %s1284
    %vm1286 = vcmask 0
    %1287 = vst.msk [vmem:[#allocation2] sm:$0x1] %vm1286, %v1285
    %v1288 = vsel %vm1196, 1, 0
    %v1289 = vsel %vm1197, 1, 0
    %v1290 = vsel %vm1198, 1, 0
    %v1291 = vsel %vm1199, 1, 0
    %v1292 = vsel %vm1200, 1, 0
    %v1293 = vsel %vm1201, 1, 0
    %v1294 = vsel %vm1202, 1, 0
    %v1295 = vsel %vm1203, 1, 0
    %v1296 = vsel %vm1204, 1, 0
    %v1297 = vsel %vm1205, 1, 0
    %v1298 = vsel %vm1206, 1, 0
    %v1299 = vsel %vm1207, 1, 0
    %v1300 = vsel %vm1208, 1, 0
    %v1301 = vsel %vm1209, 1, 0
    %v1302 = vsel %vm1210, 1, 0
    %v1303 = vsel %vm1211, 1, 0
    %v1304 = vcvt.s32.f32 %v1288
    %v1305 = vcvt.s32.f32 %v1289
    %v1306 = vcvt.s32.f32 %v1290
    %v1307 = vcvt.s32.f32 %v1291
    %v1308 = vcvt.s32.f32 %v1292
    %v1309 = vcvt.s32.f32 %v1293
    %v1310 = vcvt.s32.f32 %v1294
    %v1311 = vcvt.s32.f32 %v1295
    %v1312 = vcvt.s32.f32 %v1296
    %v1313 = vcvt.s32.f32 %v1297
    %v1314 = vcvt.s32.f32 %v1298
    %v1315 = vcvt.s32.f32 %v1299
    %v1316 = vcvt.s32.f32 %v1300
    %v1317 = vcvt.s32.f32 %v1301
    %v1318 = vcvt.s32.f32 %v1302
    %v1319 = vcvt.s32.f32 %v1303
    %v1320 = vsel %vm1244, %v1304, 0.0
    %v1321 = vsel %vm1244, %v1305, 0.0
    %v1322 = vadd.f32 %v1320, %v1321
    %v1323 = vsel %vm1244, %v1306, 0.0
    %v1324 = vadd.f32 %v1322, %v1323
    %v1325 = vsel %vm1244, %v1307, 0.0
    %v1326 = vadd.f32 %v1324, %v1325
    %v1327 = vsel %vm1244, %v1308, 0.0
    %v1328 = vadd.f32 %v1326, %v1327
    %v1329 = vsel %vm1244, %v1309, 0.0
    %v1330 = vadd.f32 %v1328, %v1329
    %v1331 = vsel %vm1244, %v1310, 0.0
    %v1332 = vadd.f32 %v1330, %v1331
    %v1333 = vsel %vm1244, %v1311, 0.0
    %v1334 = vadd.f32 %v1332, %v1333
    %v1335 = vsel %vm1244, %v1312, 0.0
    %v1336 = vadd.f32 %v1334, %v1335
    %v1337 = vsel %vm1244, %v1313, 0.0
    %v1338 = vadd.f32 %v1336, %v1337
    %v1339 = vsel %vm1244, %v1314, 0.0
    %v1340 = vadd.f32 %v1338, %v1339
    %v1341 = vsel %vm1244, %v1315, 0.0
    %v1342 = vadd.f32 %v1340, %v1341
    %v1343 = vsel %vm1244, %v1316, 0.0
    %v1344 = vadd.f32 %v1342, %v1343
    %v1345 = vsel %vm1244, %v1317, 0.0
    %v1346 = vadd.f32 %v1344, %v1345
    %v1347 = vsel %vm1244, %v1318, 0.0
    %v1348 = vadd.f32 %v1346, %v1347
    %v1349 = vsel %vm1244, %v1319, 0.0
    %v1350 = vadd.f32 %v1348, %v1349
    %1351 = vadd.xlane.f32.xlu0 %v1350
    %v1352 = vpop.xlane.xlu0 %1351
    %v1353 = vrot.slane %v1352, 4
    %v1354 = vadd.f32 %v1352, %v1353
    %v1355 = vrot.slane %v1354, 2
    %v1356 = vadd.f32 %v1354, %v1355
    %v1357 = vrot.slane %v1356, 1
    %v1358 = vadd.f32 %v1356, %v1357
    %s1359 = vtos %v1358
    %v1360 = vstv %s1359
    %1361 = vst.msk [vmem:[#allocation4] sm:$0x1] %vm1286, %v1360
    // Predicated region
    $region30: #{tpu_custom_call.1} parent=1 // pred_check
      _
    $region31: #{tpu_custom_call.1} parent=1 // pred_check_branch
      %1363 = sbr.rel (0) target = $region33
    $region32: #{tpu_custom_call.1} parent=1 // pred_region
      %1365 = vsyncadd [#allocation3], 0
      %s1367 = sshll.u32 [#allocation2], 4
      %s1368 = int_to_ptr.vmem [resolvable:$true] %s1367
      %s1369 = sshll.u32 %s7, 4
      %s1370 = int_to_ptr.hbm [resolvable:$true] %s1369
      %1372 = dma.vmem_to_hbm [thread:$0]  %s1368, 16, %s1370, [#allocation3]
    $region33: #{tpu_custom_call.1} parent=1 // pred_fallthru
      _
    // Predicated region
    $region34: #{tpu_custom_call.1} parent=1 // pred_check
      _
    $region35: #{tpu_custom_call.1} parent=1 // pred_check_branch
      %1374 = sbr.rel (0) target = $region37
    $region36: #{tpu_custom_call.1} parent=1 // pred_region
      %1376 = vsyncadd [#allocation5], 0
      %s1378 = sshll.u32 [#allocation4], 4
      %s1379 = int_to_ptr.vmem [resolvable:$true] %s1378
      %s1380 = sshll.u32 %s8, 4
      %s1381 = int_to_ptr.hbm [resolvable:$true] %s1380
      %1383 = dma.vmem_to_hbm [thread:$0]  %s1379, 16, %s1381, [#allocation5]
    $region37: #{tpu_custom_call.1} parent=1 // pred_fallthru
      _
    // Predicated region
    $region38: #{tpu_custom_call.1} parent=1 // pred_check
      _
    $region39: #{tpu_custom_call.1} parent=1 // pred_check_branch
      %1385 = sbr.rel (0) target = $region41
    $region40: #{tpu_custom_call.1} parent=1 // pred_region
      %1387 = dma.done [#allocation3], 16
    $region41: #{tpu_custom_call.1} parent=1 // pred_fallthru
      _
    // Predicated region
    $region42: #{tpu_custom_call.1} parent=1 // pred_check
      _
    $region43: #{tpu_custom_call.1} parent=1 // pred_check_branch
      %1389 = sbr.rel (0) target = $region45
    $region44: #{tpu_custom_call.1} parent=1 // pred_region
      %1391 = dma.done [#allocation5], 16
    $region45: #{tpu_custom_call.1} parent=1 // pred_fallthru
      _
    %1392 = vsyncpa [#allocation3], 1
    %1393 = vsyncpa [#allocation5], 1

</llo_original>
